<compile_context>
chip_gen: v7x
topology: tpu7x:2x2x1
jax: 0.10.0
libtpu: 0.0.40
codegen_flags: <defaults>
</compile_context>

<pallas_src>
import functools

import jax
import jax.numpy as jnp
from jax import lax
from jax.experimental import pallas as pl
from jax.experimental.pallas import tpu as pltpu


def _cast(x, dtype):
    if dtype is None or x.dtype == dtype:
        return x
    return x.astype(dtype)


# --------------------------------------------------------------------------
# Kernel 1: input projections + causal multi-head attention (head-major out).
# --------------------------------------------------------------------------
def attn_kernel(q_ref, k_ref, v_ref,
                wq_ref, bq_ref,
                wk_ref, bk_ref,
                wvr_ref, bvr_ref,
                wvl_ref, bvl_ref,
                out_ref, *, num_heads, batch_block, seq, compute_dtype):
    """One batch-block.

    Ref shapes:
      q_ref/k_ref/v_ref : (TB*S, d_model)          lane-dense row slab
      wq/wk             : (d_model, dqk)   bq/bk : (1, dqk)   (biases f32)
      wvr               : (d_model, dvz)   bvr   : (1, dvz)
      wvl               : (dvz, d_model)   bvl   : (1, d_model)
      out_ref           : (H, TB*S, d_model // H)  head-major layout
    """
    H, TB, S = num_heads, batch_block, seq

    def mm(a, b):
        return jnp.dot(_cast(a, compute_dtype), _cast(b, compute_dtype),
                       preferred_element_type=jnp.float32)

    # Projections on the full (TB*S, D) row slab -> good MXU M utilization.
    # Bias adds done once in f32.
    query = mm(q_ref[...], wq_ref[...]) + bq_ref[...]
    key = mm(k_ref[...], wk_ref[...]) + bk_ref[...]
    value = mm(mm(v_ref[...], wvr_ref[...]) + bvr_ref[...], wvl_ref[...]) + bvl_ref[...]

    dqk_h = query.shape[1] // H
    dv_h = value.shape[1] // H

    # Cast projected activations to the MXU compute dtype ONCE (not per head).
    query_c = _cast(query, compute_dtype)
    key_c = _cast(key, compute_dtype)
    value_c = _cast(value, compute_dtype)

    # Causal mask, hoisted out of the per-(head, batch) loops.
    row = lax.broadcasted_iota(jnp.int32, (S, S), 0)
    col = lax.broadcasted_iota(jnp.int32, (S, S), 1)
    keep = col <= row
    neg_inf = jnp.float32(-jnp.inf)

    # Contract the feature dim of BOTH operands: no kh.T / XLU transpose.
    dn_nt = (((1,), (1,)), ((), ()))

    for h in range(H):                       # static -> unrolled
        for b in range(TB):                  # static -> unrolled
            r0 = b * S
            qh = query_c[r0:r0 + S, h * dqk_h:(h + 1) * dqk_h]
            kh = key_c[r0:r0 + S, h * dqk_h:(h + 1) * dqk_h]
            vh = value_c[r0:r0 + S, h * dv_h:(h + 1) * dv_h]

            scores = lax.dot_general(qh, kh, dimension_numbers=dn_nt,
                                     preferred_element_type=jnp.float32)
            # NOTE: the PyTorch module applies NO 1/sqrt(d_k) scaling.
            scores = jnp.where(keep, scores, neg_inf)

            # Numerically stable softmax; EUP reciprocal-multiply normalize.
            m = jnp.max(scores, axis=-1, keepdims=True)
            p = jnp.exp(scores - m)
            inv = pl.reciprocal(jnp.sum(p, axis=-1, keepdims=True), approx=True)
            probs = p * inv

            ctx = jnp.dot(_cast(probs, compute_dtype), vh,
                          preferred_element_type=jnp.float32)

            # Direct store: no stack/concatenate epilogue; only one context
            # tile live, vst overlaps the next head's MXU pushes.
            out_ref[h, pl.ds(r0, S), :] = ctx.astype(out_ref.dtype)


# --------------------------------------------------------------------------
# Kernel 2: output projection on lane-dense (TR, D) row blocks.
# --------------------------------------------------------------------------
def out_proj_kernel(x_ref, w_ref, b_ref, out_ref, *, compute_dtype):
    out_ref[...] = (jnp.dot(_cast(x_ref[...], compute_dtype),
                            _cast(w_ref[...], compute_dtype),
                            preferred_element_type=jnp.float32)
                    + b_ref[...]).astype(out_ref.dtype)


# --------------------------------------------------------------------------
# VMEM-budgeted block selection.
# --------------------------------------------------------------------------
def _divisors(n):
    return [d for d in range(1, n + 1) if n % d == 0]


def _pick_batch_block(B, S, D, dqk, dvz, H, act_bytes, budget):
    dv_h = D // H
    # Weights + biases (double-buffered by the BlockSpec pipeline).
    w_bytes = 2 * act_bytes * (2 * D * dqk + D * dvz + dvz * D) \
        + 2 * 4 * (2 * dqk + dvz + D)

    def est(tb):
        rows = tb * S
        pipe = 2 * act_bytes * (3 * rows * D + H * rows * dv_h)          # in/out slabs, 2-deep
        inter = 4 * rows * (2 * dqk + dvz + D)                           # f32 projections
        inter += act_bytes * rows * (2 * dqk + D)                        # casted copies
        inter += 4 * 4 * S * S                                           # score/prob/mask tiles
        return w_bytes + pipe + inter

    fitting = [d for d in _divisors(B) if est(d) <= budget and (d * S) % 8 == 0]
    if not fitting:
        return 1 if S % 8 == 0 else B
    multi = [d for d in fitting if B // d >= 2]                          # prefer grid >= 2
    return max(multi) if multi else max(fitting)


def _pick_row_block(rows, D, act_bytes, budget, target=512):
    def est(tr):
        return 2 * (act_bytes + 4) * tr * D + 2 * act_bytes * D * D + 4 * D

    cands = [d for d in _divisors(rows)
             if (d % 8 == 0 or d == rows) and d <= max(target, 8) and est(d) <= budget]
    if not cands:
        return rows
    multi = [d for d in cands if rows // d >= 2]                         # prefer grid >= 2
    return max(multi) if multi else max(cands)


# --------------------------------------------------------------------------
# Wrapper.
# --------------------------------------------------------------------------
def masked_mha_forward(q, k, v, params, num_heads, *,
                       batch_block=None, row_block=None, compute_dtype=None,
                       vmem_budget_bytes=24 * 1024 * 1024):
    """compute_dtype=None -> f32 MXU matmuls; jnp.bfloat16 -> bf16 weights,
    activations and inter-kernel intermediate with f32 accumulation and an
    f32 mask/softmax epilogue (recommended on v6e/v7x)."""
    B, S, D = q.shape
    H = num_heads
    dqk = params["wq"].shape[1]
    dvz = params["wvr"].shape[1]
    dv_h = D // H
    rows = B * S

    act_bytes = 4 if compute_dtype is None else jnp.dtype(compute_dtype).itemsize
    inter_dtype = jnp.float32 if compute_dtype is None else compute_dtype

    TB = (_pick_batch_block(B, S, D, dqk, dvz, H, act_bytes, vmem_budget_bytes)
          if batch_block is None else batch_block)
    assert B % TB == 0, "batch_block must divide batch"
    kb = TB * S
    assert kb % 8 == 0 or TB == B, "TB*S must be a multiple of 8 (or TB == B)"

    vmem_limit = int(min(max(2 * vmem_budget_bytes, 32 * 1024 * 1024),
                         96 * 1024 * 1024))
    cparams = pltpu.CompilerParams(dimension_semantics=("parallel",),
                                   vmem_limit_bytes=vmem_limit)

    # Activations: free reshape to lane-dense (rows, D) slabs; cast once in the
    # wrapper so the kernel DMA moves bf16 bytes (not f32) on the bf16 path.
    q2 = _cast(q.reshape(rows, D), compute_dtype)
    k2 = _cast(k.reshape(rows, D), compute_dtype)
    v2 = _cast(v.reshape(rows, D), compute_dtype)

    # Weights cast once in the wrapper (resident tiles stay in compute dtype);
    # biases stay f32 (added to the f32 accumulator).
    wq = _cast(params["wq"], compute_dtype)
    wk = _cast(params["wk"], compute_dtype)
    wvr = _cast(params["wvr"], compute_dtype)
    wvl = _cast(params["wvl"], compute_dtype)
    wo = _cast(params["wo"], compute_dtype)
    bq, bk, bvr, bvl, bo = (params["bq"], params["bk"], params["bvr"],
                            params["bvl"], params["bo"])

    flops1 = (2 * rows * D * dqk * 2
              + 2 * rows * D * dvz
              + 2 * rows * dvz * D
              + B * H * (2 * S * S * (dqk // H) + 2 * S * S * dv_h))
    bytes1 = (act_bytes * (3 * rows * D + 2 * D * dqk + D * dvz + dvz * D
                           + H * rows * dv_h)
              + 4 * (2 * dqk + dvz + D))
    cost1 = pl.CostEstimate(flops=flops1, transcendentals=B * H * S * S,
                            bytes_accessed=bytes1)

    attn = pl.pallas_call(
        functools.partial(attn_kernel, num_heads=H, batch_block=TB, seq=S,
                          compute_dtype=compute_dtype),
        out_shape=jax.ShapeDtypeStruct((H, rows, dv_h), inter_dtype),
        grid=(B // TB,),
        in_specs=[
            pl.BlockSpec((kb, D), lambda i: (i, 0)),      # q rows
            pl.BlockSpec((kb, D), lambda i: (i, 0)),      # k rows
            pl.BlockSpec((kb, D), lambda i: (i, 0)),      # v rows
            pl.BlockSpec((D, dqk), lambda i: (0, 0)),     # wq
            pl.BlockSpec((1, dqk), lambda i: (0, 0)),     # bq
            pl.BlockSpec((D, dqk), lambda i: (0, 0)),     # wk
            pl.BlockSpec((1, dqk), lambda i: (0, 0)),     # bk
            pl.BlockSpec((D, dvz), lambda i: (0, 0)),     # wvr
            pl.BlockSpec((1, dvz), lambda i: (0, 0)),     # bvr
            pl.BlockSpec((dvz, D), lambda i: (0, 0)),     # wvl
            pl.BlockSpec((1, D), lambda i: (0, 0)),       # bvl
        ],
        out_specs=pl.BlockSpec((H, kb, dv_h), lambda i: (0, i, 0)),
        compiler_params=cparams,
        cost_estimate=cost1,
    )(q2, k2, v2, wq, bq, wk, bk, wvr, bvr, wvl, bvl)

    # PyTorch: data.transpose(0, 1).contiguous().view(B, S, -1).
    # The (H, B*S, dv_h) buffer already has the (H, B, S, dv_h) contiguous flat
    # layout, so this is a pure row-major reshape -- no transpose / HBM copy.
    data = attn.reshape(rows, D)

    TR = (_pick_row_block(rows, D, act_bytes, vmem_budget_bytes)
          if row_block is None else row_block)
    assert rows % TR == 0, "row_block must divide B*S"
    assert TR % 8 == 0 or TR == rows, "row_block must be a multiple of 8 (or == B*S)"

    cost2 = pl.CostEstimate(flops=2 * rows * D * D, transcendentals=0,
                            bytes_accessed=act_bytes * (rows * D + D * D)
                            + 4 * (rows * D + D))

    out = pl.pallas_call(
        functools.partial(out_proj_kernel, compute_dtype=compute_dtype),
        out_shape=jax.ShapeDtypeStruct((rows, D), jnp.float32),
        grid=(rows // TR,),
        in_specs=[
            pl.BlockSpec((TR, D), lambda i: (i, 0)),      # data rows
            pl.BlockSpec((D, D), lambda i: (0, 0)),       # wo (resident)
            pl.BlockSpec((1, D), lambda i: (0, 0)),       # bo
        ],
        out_specs=pl.BlockSpec((TR, D), lambda i: (i, 0)),
        compiler_params=cparams,
        cost_estimate=cost2,
    )(data, wo, bo)

    return out.reshape(B, S, D)


# --------------------------------------------------------------------------
# Pure-JAX reference mirroring the PyTorch module exactly.
# --------------------------------------------------------------------------
def reference_forward(q, k, v, params, num_heads):
    B, S, D = q.shape
    query = q @ params["wq"] + params["bq"]
    key = k @ params["wk"] + params["bk"]
    value = (v @ params["wvr"] + params["bvr"]) @ params["wvl"] + params["bvl"]

    def split_heads(x):
        return jnp.transpose(x.reshape(B, S, num_heads, -1), (0, 2, 1, 3))

    query, key, value = map(split_heads, (query, key, value))
    scores = query @ jnp.swapaxes(key, -2, -1)
    mask = jnp.triu(jnp.ones((S, S)), k=1)[None, None]
    scores = jnp.where(mask == 1, -jnp.inf, scores)
    probs = jax.nn.softmax(scores, axis=-1)
    data = probs @ value                               # (B, H, S, dv_h)
    data = jnp.transpose(data, (1, 0, 2, 3)).reshape(B, S, -1)
    return data @ params["wo"] + params["bo"]


def init_params(key, d_model, q_k_zip_dim, v_zip_dim):
    ks = jax.random.split(key, 10)
    scale = 0.02

    def w(kk, shape):
        return (scale * jax.random.normal(kk, shape)).astype(jnp.float32)

    return {
        "wq": w(ks[0], (d_model, q_k_zip_dim)),
        "bq": w(ks[1], (1, q_k_zip_dim)),
        "wk": w(ks[2], (d_model, q_k_zip_dim)),
        "bk": w(ks[3], (1, q_k_zip_dim)),
        "wvr": w(ks[4], (d_model, v_zip_dim)),
        "bvr": w(ks[5], (1, v_zip_dim)),
        "wvl": w(ks[6], (v_zip_dim, d_model)),
        "bvl": w(ks[7], (1, d_model)),
        "wo": w(ks[8], (d_model, d_model)),
        "bo": w(ks[9], (1, d_model)),
    }


if __name__ == "__main__":
    # Small shapes consistent with the module's forward.
    B, S = 2, 8
    d_model, num_heads = 32, 4
    q_k_zip_dim, v_zip_dim = 16, 16

    root = jax.random.PRNGKey(0)
    kq, kk, kv, kp = jax.random.split(root, 4)
    q = jax.random.normal(kq, (B, S, d_model), dtype=jnp.float32)
    k = jax.random.normal(kk, (B, S, d_model), dtype=jnp.float32)
    v = jax.random.normal(kv, (B, S, d_model), dtype=jnp.float32)
    params = init_params(kp, d_model, q_k_zip_dim, v_zip_dim)

    ref = reference_forward(q, k, v, params, num_heads)

    # f32 compute path (approx-reciprocal softmax -> modest tolerance).
    fwd = jax.jit(functools.partial(masked_mha_forward, num_heads=num_heads))
    out = jax.block_until_ready(fwd(q, k, v, params))
    assert out.shape == (B, S, d_model)
    assert jnp.allclose(out, ref, atol=1e-3, rtol=1e-2), "f32 mismatch vs reference"

    # bf16 MXU path (v6e/v7x recommendation; bf16 weights/activations/intermediate,
    # f32 accumulation + f32 softmax epilogue).
    fwd_bf16 = jax.jit(functools.partial(masked_mha_forward, num_heads=num_heads,
                                         compute_dtype=jnp.bfloat16))
    out_bf16 = jax.block_until_ready(fwd_bf16(q, k, v, params))
    assert out_bf16.shape == (B, S, d_model)
    assert jnp.allclose(out_bf16, ref, atol=5e-3, rtol=5e-2), "bf16 mismatch vs reference"

    print("KERNEL_OK")
</pallas_src>

<mosaic_0001>
module attributes {stable_mosaic.version = 11 : i64} {
  func.func @out_proj_kernel(%arg0: i32, %arg1: memref<8x32xf32, #tpu.memory_space<vmem>>, %arg2: memref<32x32xf32, #tpu.memory_space<vmem>>, %arg3: memref<1x32xf32, #tpu.memory_space<vmem>>, %arg4: memref<8x32xf32, #tpu.memory_space<vmem>>) attributes {dimension_semantics = [#tpu.dimension_semantics<parallel>], iteration_bounds = array<i64: 2>, scalar_prefetch = 0 : i64, scratch_operands = 0 : i64, tpu.core_type = #tpu.core_type<tc>, window_params = [{transform_indices = @transform_0, window_bounds = array<i64: 8, 32>}, {pipeline_mode = #tpu.pipeline_mode<synchronous>, transform_indices = @transform_1, window_bounds = array<i64: 32, 32>}, {pipeline_mode = #tpu.pipeline_mode<synchronous>, transform_indices = @transform_2, window_bounds = array<i64: 1, 32>}, {transform_indices = @transform_3, window_bounds = array<i64: 8, 32>}]} {
    %c0 = arith.constant 0 : index
    %c0_0 = arith.constant 0 : index
    %0 = vector.load %arg1[%c0, %c0_0] : memref<8x32xf32, #tpu.memory_space<vmem>>, vector<8x32xf32>
    %c0_1 = arith.constant 0 : index
    %c0_2 = arith.constant 0 : index
    %1 = vector.load %arg2[%c0_1, %c0_2] : memref<32x32xf32, #tpu.memory_space<vmem>>, vector<32x32xf32>
    %cst = arith.constant dense<0.000000e+00> : vector<8x32xf32>
    %2 = tpu.matmul %0, %1, %cst {dimension_numbers = #tpu.dot_dimension_numbers<[1], [0], [0], [1], [0, 0, 1, 1], [], []>} : vector<8x32xf32>, vector<32x32xf32>, vector<8x32xf32> -> vector<8x32xf32>
    %c0_3 = arith.constant 0 : index
    %c0_4 = arith.constant 0 : index
    %3 = vector.load %arg3[%c0_3, %c0_4] : memref<1x32xf32, #tpu.memory_space<vmem>>, vector<1x32xf32>
    %4 = vector.broadcast %3 : vector<1x32xf32> to vector<8x32xf32>
    %5 = arith.addf %2, %4 : vector<8x32xf32>
    %c0_5 = arith.constant 0 : index
    %c0_6 = arith.constant 0 : index
    %6 = vector.load %arg4[%c0_5, %c0_6] : memref<8x32xf32, #tpu.memory_space<vmem>>, vector<8x32xf32>
    tpu.vector_store %arg4[%c0_5, %c0_6], %5 {strides = array<i32>} : memref<8x32xf32, #tpu.memory_space<vmem>>, vector<8x32xf32>,
    return
  }
  func.func @transform_0(%arg0: i32) -> (i32, i32) {
    %c0_i32 = arith.constant 0 : i32
    %c0_i32_0 = arith.constant 0 : i32
    return %arg0, %c0_i32 : i32, i32
  }
  func.func @transform_1(%arg0: i32) -> (i32, i32) {
    %c0_i32 = arith.constant 0 : i32
    %c0_i32_0 = arith.constant 0 : i32
    %c0_i32_1 = arith.constant 0 : i32
    return %c0_i32, %c0_i32_0 : i32, i32
  }
  func.func @transform_2(%arg0: i32) -> (i32, i32) {
    %c0_i32 = arith.constant 0 : i32
    %c0_i32_0 = arith.constant 0 : i32
    %c0_i32_1 = arith.constant 0 : i32
    return %c0_i32, %c0_i32_0 : i32, i32
  }
  func.func @transform_3(%arg0: i32) -> (i32, i32) {
    %c0_i32 = arith.constant 0 : i32
    %c0_i32_0 = arith.constant 0 : i32
    return %arg0, %c0_i32 : i32, i32
  }
}

module attributes {stable_mosaic.version = 11 : i64} {
  func.func @attn_kernel(%arg0: i32, %arg1: memref<8x32xf32, #tpu.memory_space<vmem>>, %arg2: memref<8x32xf32, #tpu.memory_space<vmem>>, %arg3: memref<8x32xf32, #tpu.memory_space<vmem>>, %arg4: memref<32x16xf32, #tpu.memory_space<vmem>>, %arg5: memref<1x16xf32, #tpu.memory_space<vmem>>, %arg6: memref<32x16xf32, #tpu.memory_space<vmem>>, %arg7: memref<1x16xf32, #tpu.memory_space<vmem>>, %arg8: memref<32x16xf32, #tpu.memory_space<vmem>>, %arg9: memref<1x16xf32, #tpu.memory_space<vmem>>, %arg10: memref<16x32xf32, #tpu.memory_space<vmem>>, %arg11: memref<1x32xf32, #tpu.memory_space<vmem>>, %arg12: memref<4x8x8xf32, #tpu.memory_space<vmem>>) attributes {dimension_semantics = [#tpu.dimension_semantics<parallel>], iteration_bounds = array<i64: 2>, scalar_prefetch = 0 : i64, scratch_operands = 0 : i64, tpu.core_type = #tpu.core_type<tc>, window_params = [{transform_indices = @transform_0, window_bounds = array<i64: 8, 32>}, {transform_indices = @transform_1, window_bounds = array<i64: 8, 32>}, {transform_indices = @transform_2, window_bounds = array<i64: 8, 32>}, {pipeline_mode = #tpu.pipeline_mode<synchronous>, transform_indices = @transform_3, window_bounds = array<i64: 32, 16>}, {pipeline_mode = #tpu.pipeline_mode<synchronous>, transform_indices = @transform_4, window_bounds = array<i64: 1, 16>}, {pipeline_mode = #tpu.pipeline_mode<synchronous>, transform_indices = @transform_5, window_bounds = array<i64: 32, 16>}, {pipeline_mode = #tpu.pipeline_mode<synchronous>, transform_indices = @transform_6, window_bounds = array<i64: 1, 16>}, {pipeline_mode = #tpu.pipeline_mode<synchronous>, transform_indices = @transform_7, window_bounds = array<i64: 32, 16>}, {pipeline_mode = #tpu.pipeline_mode<synchronous>, transform_indices = @transform_8, window_bounds = array<i64: 1, 16>}, {pipeline_mode = #tpu.pipeline_mode<synchronous>, transform_indices = @transform_9, window_bounds = array<i64: 16, 32>}, {pipeline_mode = #tpu.pipeline_mode<synchronous>, transform_indices = @transform_10, window_bounds = array<i64: 1, 32>}, {transform_indices = @transform_11, window_bounds = array<i64: 4, 8, 8>}]} {
    %c0 = arith.constant 0 : index
    %c0_0 = arith.constant 0 : index
    %0 = vector.load %arg1[%c0, %c0_0] : memref<8x32xf32, #tpu.memory_space<vmem>>, vector<8x32xf32>
    %c0_1 = arith.constant 0 : index
    %c0_2 = arith.constant 0 : index
    %1 = vector.load %arg4[%c0_1, %c0_2] : memref<32x16xf32, #tpu.memory_space<vmem>>, vector<32x16xf32>
    %cst = arith.constant dense<0.000000e+00> : vector<8x16xf32>
    %2 = tpu.matmul %0, %1, %cst {dimension_numbers = #tpu.dot_dimension_numbers<[1], [0], [0], [1], [0, 0, 1, 1], [], []>} : vector<8x32xf32>, vector<32x16xf32>, vector<8x16xf32> -> vector<8x16xf32>
    %c0_3 = arith.constant 0 : index
    %c0_4 = arith.constant 0 : index
    %3 = vector.load %arg5[%c0_3, %c0_4] : memref<1x16xf32, #tpu.memory_space<vmem>>, vector<1x16xf32>
    %4 = vector.broadcast %3 : vector<1x16xf32> to vector<8x16xf32>
    %5 = arith.addf %2, %4 : vector<8x16xf32>
    %c0_5 = arith.constant 0 : index
    %c0_6 = arith.constant 0 : index
    %6 = vector.load %arg2[%c0_5, %c0_6] : memref<8x32xf32, #tpu.memory_space<vmem>>, vector<8x32xf32>
    %c0_7 = arith.constant 0 : index
    %c0_8 = arith.constant 0 : index
    %7 = vector.load %arg6[%c0_7, %c0_8] : memref<32x16xf32, #tpu.memory_space<vmem>>, vector<32x16xf32>
    %cst_9 = arith.constant dense<0.000000e+00> : vector<8x16xf32>
    %8 = tpu.matmul %6, %7, %cst_9 {dimension_numbers = #tpu.dot_dimension_numbers<[1], [0], [0], [1], [0, 0, 1, 1], [], []>} : vector<8x32xf32>, vector<32x16xf32>, vector<8x16xf32> -> vector<8x16xf32>
    %c0_10 = arith.constant 0 : index
    %c0_11 = arith.constant 0 : index
    %9 = vector.load %arg7[%c0_10, %c0_11] : memref<1x16xf32, #tpu.memory_space<vmem>>, vector<1x16xf32>
    %10 = vector.broadcast %9 : vector<1x16xf32> to vector<8x16xf32>
    %11 = arith.addf %8, %10 : vector<8x16xf32>
    %c0_12 = arith.constant 0 : index
    %c0_13 = arith.constant 0 : index
    %12 = vector.load %arg3[%c0_12, %c0_13] : memref<8x32xf32, #tpu.memory_space<vmem>>, vector<8x32xf32>
    %c0_14 = arith.constant 0 : index
    %c0_15 = arith.constant 0 : index
    %13 = vector.load %arg8[%c0_14, %c0_15] : memref<32x16xf32, #tpu.memory_space<vmem>>, vector<32x16xf32>
    %cst_16 = arith.constant dense<0.000000e+00> : vector<8x16xf32>
    %14 = tpu.matmul %12, %13, %cst_16 {dimension_numbers = #tpu.dot_dimension_numbers<[1], [0], [0], [1], [0, 0, 1, 1], [], []>} : vector<8x32xf32>, vector<32x16xf32>, vector<8x16xf32> -> vector<8x16xf32>
    %c0_17 = arith.constant 0 : index
    %c0_18 = arith.constant 0 : index
    %15 = vector.load %arg9[%c0_17, %c0_18] : memref<1x16xf32, #tpu.memory_space<vmem>>, vector<1x16xf32>
    %16 = vector.broadcast %15 : vector<1x16xf32> to vector<8x16xf32>
    %17 = arith.addf %14, %16 : vector<8x16xf32>
    %c0_19 = arith.constant 0 : index
    %c0_20 = arith.constant 0 : index
    %18 = vector.load %arg10[%c0_19, %c0_20] : memref<16x32xf32, #tpu.memory_space<vmem>>, vector<16x32xf32>
    %cst_21 = arith.constant dense<0.000000e+00> : vector<8x32xf32>
    %19 = tpu.matmul %17, %18, %cst_21 {dimension_numbers = #tpu.dot_dimension_numbers<[1], [0], [0], [1], [0, 0, 1, 1], [], []>} : vector<8x16xf32>, vector<16x32xf32>, vector<8x32xf32> -> vector<8x32xf32>
    %c0_22 = arith.constant 0 : index
    %c0_23 = arith.constant 0 : index
    %20 = vector.load %arg11[%c0_22, %c0_23] : memref<1x32xf32, #tpu.memory_space<vmem>>, vector<1x32xf32>
    %21 = vector.broadcast %20 : vector<1x32xf32> to vector<8x32xf32>
    %22 = arith.addf %19, %21 : vector<8x32xf32>
    %23 = tpu.iota {dimensions = array<i32: 0>} : vector<8x8xi32>
    %24 = tpu.iota {dimensions = array<i32: 1>} : vector<8x8xi32>
    %25 = arith.cmpi sle, %24, %23 : vector<8x8xi32>
    %26 = vector.extract_strided_slice %5 {offsets = [0, 0], sizes = [8, 4], strides = [1, 1]} : vector<8x16xf32> to vector<8x4xf32>
    %27 = vector.extract_strided_slice %11 {offsets = [0, 0], sizes = [8, 4], strides = [1, 1]} : vector<8x16xf32> to vector<8x4xf32>
    %28 = vector.extract_strided_slice %22 {offsets = [0, 0], sizes = [8, 8], strides = [1, 1]} : vector<8x32xf32> to vector<8x8xf32>
    %cst_24 = arith.constant dense<0.000000e+00> : vector<8x8xf32>
    %29 = tpu.matmul %26, %27, %cst_24 {dimension_numbers = #tpu.dot_dimension_numbers<[1], [1], [0], [0], [0, 0, 1, 0], [], []>} : vector<8x4xf32>, vector<8x4xf32>, vector<8x8xf32> -> vector<8x8xf32>
    %cst_25 = arith.constant 0xFF800000 : f32
    %30 = vector.broadcast %cst_25 : f32 to vector<8x8xf32>
    %31 = arith.select %25, %29, %30 : vector<8x8xi1>, vector<8x8xf32>
    %cst_26 = arith.constant dense<0xFF800000> : vector<8xf32>
    %32 = vector.multi_reduction <maximumf>, %31, %cst_26 [1] : vector<8x8xf32> to vector<8xf32>
    %33 = vector.shape_cast %32 : vector<8xf32> to vector<8x1xf32>
    %34 = vector.broadcast %33 : vector<8x1xf32> to vector<8x8xf32>
    %35 = arith.subf %31, %34 : vector<8x8xf32>
    %36 = math.exp %35 : vector<8x8xf32>
    %cst_27 = arith.constant dense<0.000000e+00> : vector<8xf32>
    %37 = vector.multi_reduction <add>, %36, %cst_27 [1] : vector<8x8xf32> to vector<8xf32>
    %38 = vector.shape_cast %37 : vector<8xf32> to vector<8x1xf32>
    %39 = tpu.reciprocal %38 {approx = true} : vector<8x1xf32> -> vector<8x1xf32>
    %40 = vector.broadcast %39 : vector<8x1xf32> to vector<8x8xf32>
    %41 = arith.mulf %36, %40 : vector<8x8xf32>
    %cst_28 = arith.constant dense<0.000000e+00> : vector<8x8xf32>
    %42 = tpu.matmul %41, %28, %cst_28 {dimension_numbers = #tpu.dot_dimension_numbers<[1], [0], [0], [1], [0, 0, 1, 1], [], []>} : vector<8x8xf32>, vector<8x8xf32>, vector<8x8xf32> -> vector<8x8xf32>
    %c0_29 = arith.constant 0 : index
    %c0_30 = arith.constant 0 : index
    %c0_31 = arith.constant 0 : index
    %43 = vector.load %arg12[%c0_29, %c0_30, %c0_31] : memref<4x8x8xf32, #tpu.memory_space<vmem>>, vector<1x8x8xf32>
    %44 = vector.shape_cast %43 : vector<1x8x8xf32> to vector<8x8xf32>
    %45 = vector.shape_cast %42 : vector<8x8xf32> to vector<1x8x8xf32>
    tpu.vector_store %arg12[%c0_29, %c0_30, %c0_31], %45 {strides = array<i32>} : memref<4x8x8xf32, #tpu.memory_space<vmem>>, vector<1x8x8xf32>,
    %46 = vector.extract_strided_slice %5 {offsets = [0, 4], sizes = [8, 4], strides = [1, 1]} : vector<8x16xf32> to vector<8x4xf32>
    %47 = vector.extract_strided_slice %11 {offsets = [0, 4], sizes = [8, 4], strides = [1, 1]} : vector<8x16xf32> to vector<8x4xf32>
    %48 = vector.extract_strided_slice %22 {offsets = [0, 8], sizes = [8, 8], strides = [1, 1]} : vector<8x32xf32> to vector<8x8xf32>
    %cst_32 = arith.constant dense<0.000000e+00> : vector<8x8xf32>
    %49 = tpu.matmul %46, %47, %cst_32 {dimension_numbers = #tpu.dot_dimension_numbers<[1], [1], [0], [0], [0, 0, 1, 0], [], []>} : vector<8x4xf32>, vector<8x4xf32>, vector<8x8xf32> -> vector<8x8xf32>
    %cst_33 = arith.constant 0xFF800000 : f32
    %50 = vector.broadcast %cst_33 : f32 to vector<8x8xf32>
    %51 = arith.select %25, %49, %50 : vector<8x8xi1>, vector<8x8xf32>
    %cst_34 = arith.constant dense<0xFF800000> : vector<8xf32>
    %52 = vector.multi_reduction <maximumf>, %51, %cst_34 [1] : vector<8x8xf32> to vector<8xf32>
    %53 = vector.shape_cast %52 : vector<8xf32> to vector<8x1xf32>
    %54 = vector.broadcast %53 : vector<8x1xf32> to vector<8x8xf32>
    %55 = arith.subf %51, %54 : vector<8x8xf32>
    %56 = math.exp %55 : vector<8x8xf32>
    %cst_35 = arith.constant dense<0.000000e+00> : vector<8xf32>
    %57 = vector.multi_reduction <add>, %56, %cst_35 [1] : vector<8x8xf32> to vector<8xf32>
    %58 = vector.shape_cast %57 : vector<8xf32> to vector<8x1xf32>
    %59 = tpu.reciprocal %58 {approx = true} : vector<8x1xf32> -> vector<8x1xf32>
    %60 = vector.broadcast %59 : vector<8x1xf32> to vector<8x8xf32>
    %61 = arith.mulf %56, %60 : vector<8x8xf32>
    %cst_36 = arith.constant dense<0.000000e+00> : vector<8x8xf32>
    %62 = tpu.matmul %61, %48, %cst_36 {dimension_numbers = #tpu.dot_dimension_numbers<[1], [0], [0], [1], [0, 0, 1, 1], [], []>} : vector<8x8xf32>, vector<8x8xf32>, vector<8x8xf32> -> vector<8x8xf32>
    %c1 = arith.constant 1 : index
    %c0_37 = arith.constant 0 : index
    %c0_38 = arith.constant 0 : index
    %63 = vector.load %arg12[%c1, %c0_37, %c0_38] : memref<4x8x8xf32, #tpu.memory_space<vmem>>, vector<1x8x8xf32>
    %64 = vector.shape_cast %63 : vector<1x8x8xf32> to vector<8x8xf32>
    %65 = vector.shape_cast %62 : vector<8x8xf32> to vector<1x8x8xf32>
    tpu.vector_store %arg12[%c1, %c0_37, %c0_38], %65 {strides = array<i32>} : memref<4x8x8xf32, #tpu.memory_space<vmem>>, vector<1x8x8xf32>,
    %66 = vector.extract_strided_slice %5 {offsets = [0, 8], sizes = [8, 4], strides = [1, 1]} : vector<8x16xf32> to vector<8x4xf32>
    %67 = vector.extract_strided_slice %11 {offsets = [0, 8], sizes = [8, 4], strides = [1, 1]} : vector<8x16xf32> to vector<8x4xf32>
    %68 = vector.extract_strided_slice %22 {offsets = [0, 16], sizes = [8, 8], strides = [1, 1]} : vector<8x32xf32> to vector<8x8xf32>
    %cst_39 = arith.constant dense<0.000000e+00> : vector<8x8xf32>
    %69 = tpu.matmul %66, %67, %cst_39 {dimension_numbers = #tpu.dot_dimension_numbers<[1], [1], [0], [0], [0, 0, 1, 0], [], []>} : vector<8x4xf32>, vector<8x4xf32>, vector<8x8xf32> -> vector<8x8xf32>
    %cst_40 = arith.constant 0xFF800000 : f32
    %70 = vector.broadcast %cst_40 : f32 to vector<8x8xf32>
    %71 = arith.select %25, %69, %70 : vector<8x8xi1>, vector<8x8xf32>
    %cst_41 = arith.constant dense<0xFF800000> : vector<8xf32>
    %72 = vector.multi_reduction <maximumf>, %71, %cst_41 [1] : vector<8x8xf32> to vector<8xf32>
    %73 = vector.shape_cast %72 : vector<8xf32> to vector<8x1xf32>
    %74 = vector.broadcast %73 : vector<8x1xf32> to vector<8x8xf32>
    %75 = arith.subf %71, %74 : vector<8x8xf32>
    %76 = math.exp %75 : vector<8x8xf32>
    %cst_42 = arith.constant dense<0.000000e+00> : vector<8xf32>
    %77 = vector.multi_reduction <add>, %76, %cst_42 [1] : vector<8x8xf32> to vector<8xf32>
    %78 = vector.shape_cast %77 : vector<8xf32> to vector<8x1xf32>
    %79 = tpu.reciprocal %78 {approx = true} : vector<8x1xf32> -> vector<8x1xf32>
    %80 = vector.broadcast %79 : vector<8x1xf32> to vector<8x8xf32>
    %81 = arith.mulf %76, %80 : vector<8x8xf32>
    %cst_43 = arith.constant dense<0.000000e+00> : vector<8x8xf32>
    %82 = tpu.matmul %81, %68, %cst_43 {dimension_numbers = #tpu.dot_dimension_numbers<[1], [0], [0], [1], [0, 0, 1, 1], [], []>} : vector<8x8xf32>, vector<8x8xf32>, vector<8x8xf32> -> vector<8x8xf32>
    %c2 = arith.constant 2 : index
    %c0_44 = arith.constant 0 : index
    %c0_45 = arith.constant 0 : index
    %83 = vector.load %arg12[%c2, %c0_44, %c0_45] : memref<4x8x8xf32, #tpu.memory_space<vmem>>, vector<1x8x8xf32>
    %84 = vector.shape_cast %83 : vector<1x8x8xf32> to vector<8x8xf32>
    %85 = vector.shape_cast %82 : vector<8x8xf32> to vector<1x8x8xf32>
    tpu.vector_store %arg12[%c2, %c0_44, %c0_45], %85 {strides = array<i32>} : memref<4x8x8xf32, #tpu.memory_space<vmem>>, vector<1x8x8xf32>,
    %86 = vector.extract_strided_slice %5 {offsets = [0, 12], sizes = [8, 4], strides = [1, 1]} : vector<8x16xf32> to vector<8x4xf32>
    %87 = vector.extract_strided_slice %11 {offsets = [0, 12], sizes = [8, 4], strides = [1, 1]} : vector<8x16xf32> to vector<8x4xf32>
    %88 = vector.extract_strided_slice %22 {offsets = [0, 24], sizes = [8, 8], strides = [1, 1]} : vector<8x32xf32> to vector<8x8xf32>
    %cst_46 = arith.constant dense<0.000000e+00> : vector<8x8xf32>
    %89 = tpu.matmul %86, %87, %cst_46 {dimension_numbers = #tpu.dot_dimension_numbers<[1], [1], [0], [0], [0, 0, 1, 0], [], []>} : vector<8x4xf32>, vector<8x4xf32>, vector<8x8xf32> -> vector<8x8xf32>
    %cst_47 = arith.constant 0xFF800000 : f32
    %90 = vector.broadcast %cst_47 : f32 to vector<8x8xf32>
    %91 = arith.select %25, %89, %90 : vector<8x8xi1>, vector<8x8xf32>
    %cst_48 = arith.constant dense<0xFF800000> : vector<8xf32>
    %92 = vector.multi_reduction <maximumf>, %91, %cst_48 [1] : vector<8x8xf32> to vector<8xf32>
    %93 = vector.shape_cast %92 : vector<8xf32> to vector<8x1xf32>
    %94 = vector.broadcast %93 : vector<8x1xf32> to vector<8x8xf32>
    %95 = arith.subf %91, %94 : vector<8x8xf32>
    %96 = math.exp %95 : vector<8x8xf32>
    %cst_49 = arith.constant dense<0.000000e+00> : vector<8xf32>
    %97 = vector.multi_reduction <add>, %96, %cst_49 [1] : vector<8x8xf32> to vector<8xf32>
    %98 = vector.shape_cast %97 : vector<8xf32> to vector<8x1xf32>
    %99 = tpu.reciprocal %98 {approx = true} : vector<8x1xf32> -> vector<8x1xf32>
    %100 = vector.broadcast %99 : vector<8x1xf32> to vector<8x8xf32>
    %101 = arith.mulf %96, %100 : vector<8x8xf32>
    %cst_50 = arith.constant dense<0.000000e+00> : vector<8x8xf32>
    %102 = tpu.matmul %101, %88, %cst_50 {dimension_numbers = #tpu.dot_dimension_numbers<[1], [0], [0], [1], [0, 0, 1, 1], [], []>} : vector<8x8xf32>, vector<8x8xf32>, vector<8x8xf32> -> vector<8x8xf32>
    %c3 = arith.constant 3 : index
    %c0_51 = arith.constant 0 : index
    %c0_52 = arith.constant 0 : index
    %103 = vector.load %arg12[%c3, %c0_51, %c0_52] : memref<4x8x8xf32, #tpu.memory_space<vmem>>, vector<1x8x8xf32>
    %104 = vector.shape_cast %103 : vector<1x8x8xf32> to vector<8x8xf32>
    %105 = vector.shape_cast %102 : vector<8x8xf32> to vector<1x8x8xf32>
    tpu.vector_store %arg12[%c3, %c0_51, %c0_52], %105 {strides = array<i32>} : memref<4x8x8xf32, #tpu.memory_space<vmem>>, vector<1x8x8xf32>,
    return
  }
  func.func @transform_0(%arg0: i32) -> (i32, i32) {
    %c0_i32 = arith.constant 0 : i32
    %c0_i32_0 = arith.constant 0 : i32
    return %arg0, %c0_i32 : i32, i32
  }
  func.func @transform_1(%arg0: i32) -> (i32, i32) {
    %c0_i32 = arith.constant 0 : i32
    %c0_i32_0 = arith.constant 0 : i32
    return %arg0, %c0_i32 : i32, i32
  }
  func.func @transform_2(%arg0: i32) -> (i32, i32) {
    %c0_i32 = arith.constant 0 : i32
    %c0_i32_0 = arith.constant 0 : i32
    return %arg0, %c0_i32 : i32, i32
  }
  func.func @transform_3(%arg0: i32) -> (i32, i32) {
    %c0_i32 = arith.constant 0 : i32
    %c0_i32_0 = arith.constant 0 : i32
    %c0_i32_1 = arith.constant 0 : i32
    return %c0_i32, %c0_i32_0 : i32, i32
  }
  func.func @transform_4(%arg0: i32) -> (i32, i32) {
    %c0_i32 = arith.constant 0 : i32
    %c0_i32_0 = arith.constant 0 : i32
    %c0_i32_1 = arith.constant 0 : i32
    return %c0_i32, %c0_i32_0 : i32, i32
  }
  func.func @transform_5(%arg0: i32) -> (i32, i32) {
    %c0_i32 = arith.constant 0 : i32
    %c0_i32_0 = arith.constant 0 : i32
    %c0_i32_1 = arith.constant 0 : i32
    return %c0_i32, %c0_i32_0 : i32, i32
  }
  func.func @transform_6(%arg0: i32) -> (i32, i32) {
    %c0_i32 = arith.constant 0 : i32
    %c0_i32_0 = arith.constant 0 : i32
    %c0_i32_1 = arith.constant 0 : i32
    return %c0_i32, %c0_i32_0 : i32, i32
  }
  func.func @transform_7(%arg0: i32) -> (i32, i32) {
    %c0_i32 = arith.constant 0 : i32
    %c0_i32_0 = arith.constant 0 : i32
    %c0_i32_1 = arith.constant 0 : i32
    return %c0_i32, %c0_i32_0 : i32, i32
  }
  func.func @transform_8(%arg0: i32) -> (i32, i32) {
    %c0_i32 = arith.constant 0 : i32
    %c0_i32_0 = arith.constant 0 : i32
    %c0_i32_1 = arith.constant 0 : i32
    return %c0_i32, %c0_i32_0 : i32, i32
  }
  func.func @transform_9(%arg0: i32) -> (i32, i32) {
    %c0_i32 = arith.constant 0 : i32
    %c0_i32_0 = arith.constant 0 : i32
    %c0_i32_1 = arith.constant 0 : i32
    return %c0_i32, %c0_i32_0 : i32, i32
  }
  func.func @transform_10(%arg0: i32) -> (i32, i32) {
    %c0_i32 = arith.constant 0 : i32
    %c0_i32_0 = arith.constant 0 : i32
    %c0_i32_1 = arith.constant 0 : i32
    return %c0_i32, %c0_i32_0 : i32, i32
  }
  func.func @transform_11(%arg0: i32) -> (i32, i32, i32) {
    %c0_i32 = arith.constant 0 : i32
    %c0_i32_0 = arith.constant 0 : i32
    %c0_i32_1 = arith.constant 0 : i32
    return %c0_i32, %arg0, %c0_i32_0 : i32, i32, i32
  }
}

</mosaic_0001>

<llo_original>
// kernel: masked_mha_forward.3
$region0: #{masked_mha_forward.3}
  #allocation0 [shape = 'u32[]', space=smem, size = 0x4, offset = 0x4, fixed_abs, tag = 'smem constant byte address 0x4 - core index']
  #allocation1 [shape = 'u32[144,128]{1,0:T(1,128)}', space=vmem, size = 0x12000, scoped, tag = 'internal scratch']
  %s0 = inlined_call_operand.vmem [shape: f32[16,32], index: 0, kind: input, shape index: {}]
  %s1 = inlined_call_operand.vmem [shape: f32[32,32], index: 1, kind: input, shape index: {}]
  %s2 = inlined_call_operand.vmem [shape: f32[1,32], index: 2, kind: input, shape index: {}]
  %s3 = inlined_call_operand.hbm [shape: f32[16,32], index: 3, kind: output, shape index: {}]
  %s4 = sld [smem:[#allocation0]]
  $region45: #{masked_mha_forward.3} parent=0
    _
  %s6 = ssub.s32 1, %s4
  %s7 = scalar_select 0, %s6, %s4
  $region1: #{masked_mha_forward.3} parent=0
    #allocation2 [shape = 'u8[8192]{0}', space=vmem, size = 0x2000, scoped, tag = 'output window, operand 0']
    #allocation3 [shape = 's32[2]{0}', space=sflag, size = 0x8, scoped, tag = 'scoped memory for masked_mha_forward.3']
    %8 = vsyncpa [#allocation3], 0
    %s9 = scalar_lea.sflag [#allocation3], 1
    %10 = vsyncpa %s9, 0
    loop: start=0, step=1, limit=4
    $region2: #{masked_mha_forward.3} parent=1 // loop_pre_header
      _
    $region3: #{masked_mha_forward.3} parent=1 // loop_header
      %s12 = sphi 0, %s16
      %p13 = scmp.ge.s32.totalorder %s12, 4
      %s22 = sphi 0, %s24
      %s25 = sphi 0, %s22
      %s26 = sphi 0, %s25
      %s42 = sphi 0, %s26
      %s46 = sphi 0, %s46
      %s48 = sphi 0, %s46
      %s49 = sphi 0, %s48
      %s63 = sphi 0, %s49
      %s67 = sphi 0, %s67
      %s69 = sphi 0, %s67
      %s70 = sphi 0, %s69
      %s84 = sphi 0, %s70
      %s90 = sphi 0, %s92
      %s93 = sphi 0, %s90
      %s94 = sphi 0, %s93
      %s110 = sphi 0, %s94
    $region4: #{masked_mha_forward.3} parent=1 // loop_header_branch
      %15 = sbr.rel (%p13) target = $region8
    $region5: #{masked_mha_forward.3} parent=1 // loop_body
      %s17 = ssub.s32 %s12, 1
      %s18 = ssub.s32 %s12, 2
      %s19 = sadd.s32 %s12, 1
      %s20 = ssub.s32 %s12, %s19
      %p21 = scmp.eq.s32.totalorder %s20, 0
      %s23 = sadd.s32 %s22, 1
      %s24 = scalar_select %p21, %s22, %s23
      %p27 = pneg %p21
      %p28 = scmp.eq.s32.totalorder %s12, 1
      %p29 = por %p27, %p28
      %p30 = scmp.ne.s32.totalorder %s22, %s25
      %p31 = scmp.eq.s32.totalorder %s12, 0
      %p32 = por %p30, %p31
      %p33 = scmp.ne.s32.totalorder %s22, %s25
      %p34 = scmp.eq.s32.totalorder %s17, 1
      %p35 = por %p33, %p34
      %p36 = scmp.ne.s32.totalorder %s25, %s26
      %p37 = scmp.eq.s32.totalorder %s17, 0
      %p38 = por %p36, %p37
      %p39 = scmp.ne.s32.totalorder %s25, %s26
      %p40 = scmp.eq.s32.totalorder %s18, 1
      %p41 = por %p39, %p40
      %p43 = scmp.ne.s32.totalorder %s26, %s42
      %p44 = scmp.eq.s32.totalorder %s18, 0
      %p45 = por %p43, %p44
      %s47 = sadd.s32 %s46, 1
      %p50 = scmp.eq.s32.totalorder %s12, 1
      %p51 = scmp.ne.s32.totalorder %s46, %s48
      %p52 = scmp.eq.s32.totalorder %s12, 0
      %p53 = por %p51, %p52
      %p54 = scmp.ne.s32.totalorder %s46, %s48
      %p55 = scmp.eq.s32.totalorder %s17, 1
      %p56 = por %p54, %p55
      %p57 = scmp.ne.s32.totalorder %s48, %s49
      %p58 = scmp.eq.s32.totalorder %s17, 0
      %p59 = por %p57, %p58
      %p60 = scmp.ne.s32.totalorder %s48, %s49
      %p61 = scmp.eq.s32.totalorder %s18, 1
      %p62 = por %p60, %p61
      %p64 = scmp.ne.s32.totalorder %s49, %s63
      %p65 = scmp.eq.s32.totalorder %s18, 0
      %p66 = por %p64, %p65
      %s68 = sadd.s32 %s67, 1
      %p71 = scmp.eq.s32.totalorder %s12, 1
      %p72 = scmp.ne.s32.totalorder %s67, %s69
      %p73 = scmp.eq.s32.totalorder %s12, 0
      %p74 = por %p72, %p73
      %p75 = scmp.ne.s32.totalorder %s67, %s69
      %p76 = scmp.eq.s32.totalorder %s17, 1
      %p77 = por %p75, %p76
      %p78 = scmp.ne.s32.totalorder %s69, %s70
      %p79 = scmp.eq.s32.totalorder %s17, 0
      %p80 = por %p78, %p79
      %p81 = scmp.ne.s32.totalorder %s69, %s70
      %p82 = scmp.eq.s32.totalorder %s18, 1
      %p83 = por %p81, %p82
      %p85 = scmp.ne.s32.totalorder %s70, %s84
      %p86 = scmp.eq.s32.totalorder %s18, 0
      %p87 = por %p85, %p86
      %s88 = ssub.s32 %s12, %s19
      %p89 = scmp.eq.s32.totalorder %s88, 0
      %s91 = sadd.s32 %s90, 1
      %s92 = scalar_select %p89, %s90, %s91
      %p95 = pneg %p89
      %p96 = scmp.eq.s32.totalorder %s12, 1
      %p97 = por %p95, %p96
      %p98 = scmp.ne.s32.totalorder %s90, %s93
      %p99 = scmp.eq.s32.totalorder %s12, 0
      %p100 = por %p98, %p99
      %p101 = scmp.ne.s32.totalorder %s90, %s93
      %p102 = scmp.eq.s32.totalorder %s17, 1
      %p103 = por %p101, %p102
      %p104 = scmp.ne.s32.totalorder %s93, %s94
      %p105 = scmp.eq.s32.totalorder %s17, 0
      %p106 = por %p104, %p105
      %p107 = scmp.ne.s32.totalorder %s93, %s94
      %p108 = scmp.eq.s32.totalorder %s18, 1
      %p109 = por %p107, %p108
      %p111 = scmp.ne.s32.totalorder %s94, %s110
      %p112 = scmp.eq.s32.totalorder %s18, 0
      %p113 = por %p111, %p112
      %p114 = scmp.le.s32.totalorder 1, %s12
      %p115 = scmp.lt.s32.totalorder %s12, 3
      %p116 = pnand %p114, %p115
      %p117 = pneg %p116
      // Predicated region
      $region9: #{masked_mha_forward.3} parent=5 // pred_check
        _
      $region10: #{masked_mha_forward.3} parent=5 // pred_check_branch
        %119 = sbr.rel (%p116) target = $region12
      $region11: #{masked_mha_forward.3} parent=5 // pred_region
        %s120 = ssub.s32 %s12, 1
        // Predicated region
        $region13: #{masked_mha_forward.3} parent=11 // pred_check
          %p121 = pneg %p59
        $region14: #{masked_mha_forward.3} parent=11 // pred_check_branch
          %123 = sbr.rel (%p121) target = $region16
        $region15: #{masked_mha_forward.3} parent=11 // pred_region
          _
        $region16: #{masked_mha_forward.3} parent=11 // pred_fallthru
          _
        // Predicated region
        $region17: #{masked_mha_forward.3} parent=11 // pred_check
          %p124 = pneg %p80
        $region18: #{masked_mha_forward.3} parent=11 // pred_check_branch
          %126 = sbr.rel (%p124) target = $region20
        $region19: #{masked_mha_forward.3} parent=11 // pred_region
          _
        $region20: #{masked_mha_forward.3} parent=11 // pred_fallthru
          _
      $region12: #{masked_mha_forward.3} parent=5 // pred_fallthru
        _
      %p127 = scmp.lt.s32.totalorder %s12, 2
      // Predicated region
      $region21: #{masked_mha_forward.3} parent=5 // pred_check
        %p128 = pneg %p127
      $region22: #{masked_mha_forward.3} parent=5 // pred_check_branch
        %130 = sbr.rel (%p128) target = $region24
      $region23: #{masked_mha_forward.3} parent=5 // pred_region
        // Predicated region
        $region25: #{masked_mha_forward.3} parent=23 // pred_check
          %p131 = pneg %p32
        $region26: #{masked_mha_forward.3} parent=23 // pred_check_branch
          %133 = sbr.rel (%p131) target = $region28
        $region27: #{masked_mha_forward.3} parent=23 // pred_region
          %p134 = scmp.lt.s32.totalorder %s12, 1
          %s135 = scalar_select %p134, %s12, 1
          %s136 = smul.addr %s135, 8
          %s137 = scalar_lea.vmem %s0, %s136
        $region28: #{masked_mha_forward.3} parent=23 // pred_fallthru
          _
      $region24: #{masked_mha_forward.3} parent=5 // pred_fallthru
        _
      %p138 = scmp.le.s32.totalorder 1, %s12
      %p139 = scmp.lt.s32.totalorder %s12, 3
      %p140 = pnand %p138, %p139
      %p141 = pneg %p140
      // Predicated region
      $region29: #{masked_mha_forward.3} parent=5 // pred_check
        _
      $region30: #{masked_mha_forward.3} parent=5 // pred_check_branch
        %143 = sbr.rel (%p140) target = $region32
      $region31: #{masked_mha_forward.3} parent=5 // pred_region
        %s144 = ssub.s32 %s12, 1
        %p145 = scmp.lt.s32.totalorder %s17, 1
        %s146 = scalar_select %p145, %s17, 1
        %s147 = smul.addr %s146, 8
        %s148 = scalar_lea.vmem %s0, %s147
        %p149 = pneg %p38
        %p150 = pneg %p35
        %p151 = pneg %p59
        %p152 = pneg %p56
        %p153 = pneg %p80
        %p154 = pneg %p77
        %p155 = pneg %p106
        %p156 = pneg %p103
        %s157 = sand.u32 %s93, 1
        %s158 = scalar_lea.sflag [#allocation3], %s157
        %s159 = sand.u32 %s93, 1
        %s160 = smul.addr %s159, 8
        %s161 = scalar_lea.vmem [#allocation2], %s160
        %p162 = scmp.lt.s32.totalorder %s17, 1
        %s163 = scalar_select %p162, %s17, 1
        %s164 = smul.addr %s163, 8
        %s165 = scalar_lea.vmem %s0, %s164
        %v166 = vld [vmem:[%s165] sm:$0xff]
        %v167 = vld [vmem:[%s1] sm:$0xff]
        %v168 = vld [vmem:[%s1 + $0x8] sm:$0xff]
        %v169 = vld [vmem:[%s1 + $0x10] sm:$0xff]
        %v170 = vld [vmem:[%s1 + $0x18] sm:$0xff]
        %v171 = vld [vmem:[%s2] sm:$0x1]
        %v173 = vlaneseq
        %v174 = vshrl.u32 %v173, 7
        %v175 = vsub.s32 0, %v174
        %v176 = vrot.slane %v171, %v175
        %vm178 = vcmask 261120
        %v180 = vsel %vm178, %v166, 0
        %182 = vmatprep.subr.mxu0 0.0
        %183 = vmatpush1.msra.mxu0 %v167
        %184 = vmatprep.subr.mxu0 0.0
        %185 = vmatpush1.msra.mxu0 %v168
        %186 = vmatprep.subr.mxu0 0.0
        %187 = vmatpush1.msra.mxu0 %v169
        %188 = vmatprep.subr.mxu0 0.0
        %189 = vmatpush1.msra.mxu0 %v170
        %190 = vmatprep.subr.mxu0 0.0
        %191 = vmatpush1.msra.mxu0 0.0
        %192 = vmatprep.subr.mxu0 0.0
        %193 = vmatpush1.msra.mxu0 0.0
        %194 = vmatprep.subr.mxu0 0.0
        %195 = vmatpush1.msra.mxu0 0.0
        %196 = vmatprep.subr.mxu0 0.0
        %197 = vmatpush1.msra.mxu0 0.0
        %198 = vmatprep.subr.mxu0 0.0
        %199 = vmatpush1.msra.mxu0 0.0
        %200 = vmatprep.subr.mxu0 0.0
        %201 = vmatpush1.msra.mxu0 0.0
        %202 = vmatprep.subr.mxu0 0.0
        %203 = vmatpush1.msra.mxu0 0.0
        %204 = vmatprep.subr.mxu0 0.0
        %205 = vmatpush1.msra.mxu0 0.0
        %206 = vmatprep.subr.mxu0 0.0
        %207 = vmatpush1.msra.mxu0 0.0
        %208 = vmatprep.subr.mxu0 0.0
        %209 = vmatpush1.msra.mxu0 0.0
        %210 = vmatprep.subr.mxu0 0.0
        %211 = vmatpush1.msra.mxu0 0.0
        %212 = vmatprep.subr.mxu0 0.0
        %213 = vmatpush1.msra.mxu0 0.0
        %214 = vmatprep.subr.mxu0 0.0
        %215 = vmatpush1.msra.mxu0 0.0
        %216 = vmatprep.subr.mxu0 0.0
        %217 = vmatpush1.msra.mxu0 0.0
        %218 = vmatprep.subr.mxu0 0.0
        %219 = vmatpush1.msra.mxu0 0.0
        %220 = vmatprep.subr.mxu0 0.0
        %221 = vmatpush1.msra.mxu0 0.0
        %222 = vmatprep.subr.mxu0 0.0
        %223 = vmatpush1.msra.mxu0 0.0
        %224 = vmatprep.subr.mxu0 0.0
        %225 = vmatpush1.msra.mxu0 0.0
        %226 = vmatprep.subr.mxu0 0.0
        %227 = vmatpush1.msra.mxu0 0.0
        %228 = vmatprep.subr.mxu0 0.0
        %229 = vmatpush1.msra.mxu0 0.0
        %230 = vmatprep.subr.mxu0 0.0
        %231 = vmatpush1.msra.mxu0 0.0
        %232 = vmatprep.subr.mxu0 0.0
        %233 = vmatpush1.msra.mxu0 0.0
        %234 = vmatprep.subr.mxu0 0.0
        %235 = vmatpush1.msra.mxu0 0.0
        %236 = vmatprep.subr.mxu0 0.0
        %237 = vmatpush1.msra.mxu0 0.0
        %238 = vmatprep.subr.mxu0 0.0
        %239 = vmatpush1.msra.mxu0 0.0
        %240 = vmatprep.subr.mxu0 0.0
        %241 = vmatpush1.msra.mxu0 0.0
        %242 = vmatprep.subr.mxu0 0.0
        %243 = vmatpush1.msra.mxu0 0.0
        %244 = vmatprep.subr.mxu0 0.0
        %245 = vmatpush1.msra.mxu0 0.0
        %246 = vmatprep.mubr.f32.mxu0 0.0
        %247 = vmatmul.mubr.f32.gmra.mrb[0].mxu0 %v180
        %v248 = vpop.f32.mrb[0].mxu0
        %v249 = vadd.f32 %v176, %v248
        %v250 = vpop.f32.mrb[0].mxu0
        %251 = vdwg.mxu0
        %252 = vst.msk [vmem:[%s161] sm:$0xff] %vm178, %v249
        %s253 = sand.u32 %s93, 1
        %s254 = scalar_lea.sflag [#allocation3], %s253
        %s255 = sand.u32 %s93, 1
        %s256 = smul.addr %s255, 8
        %s257 = scalar_lea.vmem [#allocation2], %s256
        // Predicated region
        $region33: #{masked_mha_forward.3} parent=31 // pred_check
          %p258 = pneg %p103
        $region34: #{masked_mha_forward.3} parent=31 // pred_check_branch
          %260 = sbr.rel (%p258) target = $region36
        $region35: #{masked_mha_forward.3} parent=31 // pred_region
          %s262 = ssub.s32 128, 128
          %263 = vsyncadd %s254, %s262
          %s264 = smul.addr %s17, 128
          %s265 = scalar_lea.hbm %s3, %s264
          %s267 = sshll.u32 %s257, 4
          %s268 = int_to_ptr.vmem [resolvable:$true] %s267
          %270 = dma.vmem_to_hbm [thread:$0]  %s268, 128, %s265, %s254
        $region36: #{masked_mha_forward.3} parent=31 // pred_fallthru
          _
      $region32: #{masked_mha_forward.3} parent=5 // pred_fallthru
        _
      %p271 = scmp.le.s32.totalorder 2, %s12
      // Predicated region
      $region37: #{masked_mha_forward.3} parent=5 // pred_check
        %p272 = pneg %p271
      $region38: #{masked_mha_forward.3} parent=5 // pred_check_branch
        %274 = sbr.rel (%p272) target = $region40
      $region39: #{masked_mha_forward.3} parent=5 // pred_region
        %s275 = ssub.s32 %s12, 2
        // Predicated region
        $region41: #{masked_mha_forward.3} parent=39 // pred_check
          %p276 = pneg %p109
        $region42: #{masked_mha_forward.3} parent=39 // pred_check_branch
          %278 = sbr.rel (%p276) target = $region44
        $region43: #{masked_mha_forward.3} parent=39 // pred_region
          %s279 = sand.u32 %s94, 1
          %s280 = scalar_lea.sflag [#allocation3], %s279
          %s281 = sand.u32 %s94, 1
          %s282 = smul.addr %s281, 8
          %s283 = scalar_lea.vmem [#allocation2], %s282
          %284 = dma.done %s280, 128
        $region44: #{masked_mha_forward.3} parent=39 // pred_fallthru
          _
      $region40: #{masked_mha_forward.3} parent=5 // pred_fallthru
        _
    $region6: #{masked_mha_forward.3} parent=1 // loop_footer
      %s16 = sadd.s32 1, %s12
    $region7: #{masked_mha_forward.3} parent=1 // loop_footer_branch
      %11 = sbr.rel target = $region3
    $region8: #{masked_mha_forward.3} parent=1 // loop_exit
      _
    %285 = vsyncpa [#allocation3], 1
    %s286 = scalar_lea.sflag [#allocation3], 1
    %287 = vsyncpa %s286, 1

// kernel: masked_mha_forward.2
$region0: #{masked_mha_forward.2}
  #allocation0 [shape = 'u32[]', space=smem, size = 0x4, offset = 0x4, fixed_abs, tag = 'smem constant byte address 0x4 - core index']
  #allocation1 [shape = 'u32[144,128]{1,0:T(1,128)}', space=vmem, size = 0x12000, scoped, tag = 'internal scratch']
  %s0 = inlined_call_operand.vmem [shape: f32[16,32], index: 0, kind: input, shape index: {}]
  %s1 = inlined_call_operand.vmem [shape: f32[16,32], index: 1, kind: input, shape index: {}]
  %s2 = inlined_call_operand.vmem [shape: f32[16,32], index: 2, kind: input, shape index: {}]
  %s3 = inlined_call_operand.vmem [shape: f32[32,16], index: 3, kind: input, shape index: {}]
  %s4 = inlined_call_operand.vmem [shape: f32[1,16], index: 4, kind: input, shape index: {}]
  %s5 = inlined_call_operand.vmem [shape: f32[32,16], index: 5, kind: input, shape index: {}]
  %s6 = inlined_call_operand.vmem [shape: f32[1,16], index: 6, kind: input, shape index: {}]
  %s7 = inlined_call_operand.vmem [shape: f32[32,16], index: 7, kind: input, shape index: {}]
  %s8 = inlined_call_operand.vmem [shape: f32[1,16], index: 8, kind: input, shape index: {}]
  %s9 = inlined_call_operand.vmem [shape: f32[16,32], index: 9, kind: input, shape index: {}]
  %s10 = inlined_call_operand.vmem [shape: f32[1,32], index: 10, kind: input, shape index: {}]
  %s11 = inlined_call_operand.vmem [shape: f32[4,16,8], index: 11, kind: output, shape index: {}]
  %s12 = sld [smem:[#allocation0]]
  $region111: #{masked_mha_forward.2} parent=0
    _
  %s14 = ssub.s32 1, %s12
  %s15 = scalar_select 0, %s14, %s12
  $region1: #{masked_mha_forward.2} parent=0
    #allocation2 [shape = 'u8[32768]{0}', space=vmem, size = 0x8000, scoped, tag = 'output window, operand 0']
    loop: start=0, step=1, limit=4
    $region2: #{masked_mha_forward.2} parent=1 // loop_pre_header
      _
    $region3: #{masked_mha_forward.2} parent=1 // loop_header
      %s17 = sphi 0, %s21
      %p18 = scmp.ge.s32.totalorder %s17, 4
      %s27 = sphi 0, %s29
      %s30 = sphi 0, %s27
      %s31 = sphi 0, %s30
      %s47 = sphi 0, %s31
      %s53 = sphi 0, %s55
      %s56 = sphi 0, %s53
      %s57 = sphi 0, %s56
      %s73 = sphi 0, %s57
      %s79 = sphi 0, %s81
      %s82 = sphi 0, %s79
      %s83 = sphi 0, %s82
      %s99 = sphi 0, %s83
      %s103 = sphi 0, %s103
      %s105 = sphi 0, %s103
      %s106 = sphi 0, %s105
      %s120 = sphi 0, %s106
      %s124 = sphi 0, %s124
      %s126 = sphi 0, %s124
      %s127 = sphi 0, %s126
      %s141 = sphi 0, %s127
      %s145 = sphi 0, %s145
      %s147 = sphi 0, %s145
      %s148 = sphi 0, %s147
      %s162 = sphi 0, %s148
      %s166 = sphi 0, %s166
      %s168 = sphi 0, %s166
      %s169 = sphi 0, %s168
      %s183 = sphi 0, %s169
      %s187 = sphi 0, %s187
      %s189 = sphi 0, %s187
      %s190 = sphi 0, %s189
      %s204 = sphi 0, %s190
      %s208 = sphi 0, %s208
      %s210 = sphi 0, %s208
      %s211 = sphi 0, %s210
      %s225 = sphi 0, %s211
      %s229 = sphi 0, %s229
      %s231 = sphi 0, %s229
      %s232 = sphi 0, %s231
      %s246 = sphi 0, %s232
      %s250 = sphi 0, %s250
      %s252 = sphi 0, %s250
      %s253 = sphi 0, %s252
      %s267 = sphi 0, %s253
      %s273 = sphi 0, %s275
      %s276 = sphi 0, %s273
      %s277 = sphi 0, %s276
      %s293 = sphi 0, %s277
    $region4: #{masked_mha_forward.2} parent=1 // loop_header_branch
      %20 = sbr.rel (%p18) target = $region8
    $region5: #{masked_mha_forward.2} parent=1 // loop_body
      %s22 = ssub.s32 %s17, 1
      %s23 = ssub.s32 %s17, 2
      %s24 = sadd.s32 %s17, 1
      %s25 = ssub.s32 %s17, %s24
      %p26 = scmp.eq.s32.totalorder %s25, 0
      %s28 = sadd.s32 %s27, 1
      %s29 = scalar_select %p26, %s27, %s28
      %p32 = pneg %p26
      %p33 = scmp.eq.s32.totalorder %s17, 1
      %p34 = por %p32, %p33
      %p35 = scmp.ne.s32.totalorder %s27, %s30
      %p36 = scmp.eq.s32.totalorder %s17, 0
      %p37 = por %p35, %p36
      %p38 = scmp.ne.s32.totalorder %s27, %s30
      %p39 = scmp.eq.s32.totalorder %s22, 1
      %p40 = por %p38, %p39
      %p41 = scmp.ne.s32.totalorder %s30, %s31
      %p42 = scmp.eq.s32.totalorder %s22, 0
      %p43 = por %p41, %p42
      %p44 = scmp.ne.s32.totalorder %s30, %s31
      %p45 = scmp.eq.s32.totalorder %s23, 1
      %p46 = por %p44, %p45
      %p48 = scmp.ne.s32.totalorder %s31, %s47
      %p49 = scmp.eq.s32.totalorder %s23, 0
      %p50 = por %p48, %p49
      %s51 = ssub.s32 %s17, %s24
      %p52 = scmp.eq.s32.totalorder %s51, 0
      %s54 = sadd.s32 %s53, 1
      %s55 = scalar_select %p52, %s53, %s54
      %p58 = pneg %p52
      %p59 = scmp.eq.s32.totalorder %s17, 1
      %p60 = por %p58, %p59
      %p61 = scmp.ne.s32.totalorder %s53, %s56
      %p62 = scmp.eq.s32.totalorder %s17, 0
      %p63 = por %p61, %p62
      %p64 = scmp.ne.s32.totalorder %s53, %s56
      %p65 = scmp.eq.s32.totalorder %s22, 1
      %p66 = por %p64, %p65
      %p67 = scmp.ne.s32.totalorder %s56, %s57
      %p68 = scmp.eq.s32.totalorder %s22, 0
      %p69 = por %p67, %p68
      %p70 = scmp.ne.s32.totalorder %s56, %s57
      %p71 = scmp.eq.s32.totalorder %s23, 1
      %p72 = por %p70, %p71
      %p74 = scmp.ne.s32.totalorder %s57, %s73
      %p75 = scmp.eq.s32.totalorder %s23, 0
      %p76 = por %p74, %p75
      %s77 = ssub.s32 %s17, %s24
      %p78 = scmp.eq.s32.totalorder %s77, 0
      %s80 = sadd.s32 %s79, 1
      %s81 = scalar_select %p78, %s79, %s80
      %p84 = pneg %p78
      %p85 = scmp.eq.s32.totalorder %s17, 1
      %p86 = por %p84, %p85
      %p87 = scmp.ne.s32.totalorder %s79, %s82
      %p88 = scmp.eq.s32.totalorder %s17, 0
      %p89 = por %p87, %p88
      %p90 = scmp.ne.s32.totalorder %s79, %s82
      %p91 = scmp.eq.s32.totalorder %s22, 1
      %p92 = por %p90, %p91
      %p93 = scmp.ne.s32.totalorder %s82, %s83
      %p94 = scmp.eq.s32.totalorder %s22, 0
      %p95 = por %p93, %p94
      %p96 = scmp.ne.s32.totalorder %s82, %s83
      %p97 = scmp.eq.s32.totalorder %s23, 1
      %p98 = por %p96, %p97
      %p100 = scmp.ne.s32.totalorder %s83, %s99
      %p101 = scmp.eq.s32.totalorder %s23, 0
      %p102 = por %p100, %p101
      %s104 = sadd.s32 %s103, 1
      %p107 = scmp.eq.s32.totalorder %s17, 1
      %p108 = scmp.ne.s32.totalorder %s103, %s105
      %p109 = scmp.eq.s32.totalorder %s17, 0
      %p110 = por %p108, %p109
      %p111 = scmp.ne.s32.totalorder %s103, %s105
      %p112 = scmp.eq.s32.totalorder %s22, 1
      %p113 = por %p111, %p112
      %p114 = scmp.ne.s32.totalorder %s105, %s106
      %p115 = scmp.eq.s32.totalorder %s22, 0
      %p116 = por %p114, %p115
      %p117 = scmp.ne.s32.totalorder %s105, %s106
      %p118 = scmp.eq.s32.totalorder %s23, 1
      %p119 = por %p117, %p118
      %p121 = scmp.ne.s32.totalorder %s106, %s120
      %p122 = scmp.eq.s32.totalorder %s23, 0
      %p123 = por %p121, %p122
      %s125 = sadd.s32 %s124, 1
      %p128 = scmp.eq.s32.totalorder %s17, 1
      %p129 = scmp.ne.s32.totalorder %s124, %s126
      %p130 = scmp.eq.s32.totalorder %s17, 0
      %p131 = por %p129, %p130
      %p132 = scmp.ne.s32.totalorder %s124, %s126
      %p133 = scmp.eq.s32.totalorder %s22, 1
      %p134 = por %p132, %p133
      %p135 = scmp.ne.s32.totalorder %s126, %s127
      %p136 = scmp.eq.s32.totalorder %s22, 0
      %p137 = por %p135, %p136
      %p138 = scmp.ne.s32.totalorder %s126, %s127
      %p139 = scmp.eq.s32.totalorder %s23, 1
      %p140 = por %p138, %p139
      %p142 = scmp.ne.s32.totalorder %s127, %s141
      %p143 = scmp.eq.s32.totalorder %s23, 0
      %p144 = por %p142, %p143
      %s146 = sadd.s32 %s145, 1
      %p149 = scmp.eq.s32.totalorder %s17, 1
      %p150 = scmp.ne.s32.totalorder %s145, %s147
      %p151 = scmp.eq.s32.totalorder %s17, 0
      %p152 = por %p150, %p151
      %p153 = scmp.ne.s32.totalorder %s145, %s147
      %p154 = scmp.eq.s32.totalorder %s22, 1
      %p155 = por %p153, %p154
      %p156 = scmp.ne.s32.totalorder %s147, %s148
      %p157 = scmp.eq.s32.totalorder %s22, 0
      %p158 = por %p156, %p157
      %p159 = scmp.ne.s32.totalorder %s147, %s148
      %p160 = scmp.eq.s32.totalorder %s23, 1
      %p161 = por %p159, %p160
      %p163 = scmp.ne.s32.totalorder %s148, %s162
      %p164 = scmp.eq.s32.totalorder %s23, 0
      %p165 = por %p163, %p164
      %s167 = sadd.s32 %s166, 1
      %p170 = scmp.eq.s32.totalorder %s17, 1
      %p171 = scmp.ne.s32.totalorder %s166, %s168
      %p172 = scmp.eq.s32.totalorder %s17, 0
      %p173 = por %p171, %p172
      %p174 = scmp.ne.s32.totalorder %s166, %s168
      %p175 = scmp.eq.s32.totalorder %s22, 1
      %p176 = por %p174, %p175
      %p177 = scmp.ne.s32.totalorder %s168, %s169
      %p178 = scmp.eq.s32.totalorder %s22, 0
      %p179 = por %p177, %p178
      %p180 = scmp.ne.s32.totalorder %s168, %s169
      %p181 = scmp.eq.s32.totalorder %s23, 1
      %p182 = por %p180, %p181
      %p184 = scmp.ne.s32.totalorder %s169, %s183
      %p185 = scmp.eq.s32.totalorder %s23, 0
      %p186 = por %p184, %p185
      %s188 = sadd.s32 %s187, 1
      %p191 = scmp.eq.s32.totalorder %s17, 1
      %p192 = scmp.ne.s32.totalorder %s187, %s189
      %p193 = scmp.eq.s32.totalorder %s17, 0
      %p194 = por %p192, %p193
      %p195 = scmp.ne.s32.totalorder %s187, %s189
      %p196 = scmp.eq.s32.totalorder %s22, 1
      %p197 = por %p195, %p196
      %p198 = scmp.ne.s32.totalorder %s189, %s190
      %p199 = scmp.eq.s32.totalorder %s22, 0
      %p200 = por %p198, %p199
      %p201 = scmp.ne.s32.totalorder %s189, %s190
      %p202 = scmp.eq.s32.totalorder %s23, 1
      %p203 = por %p201, %p202
      %p205 = scmp.ne.s32.totalorder %s190, %s204
      %p206 = scmp.eq.s32.totalorder %s23, 0
      %p207 = por %p205, %p206
      %s209 = sadd.s32 %s208, 1
      %p212 = scmp.eq.s32.totalorder %s17, 1
      %p213 = scmp.ne.s32.totalorder %s208, %s210
      %p214 = scmp.eq.s32.totalorder %s17, 0
      %p215 = por %p213, %p214
      %p216 = scmp.ne.s32.totalorder %s208, %s210
      %p217 = scmp.eq.s32.totalorder %s22, 1
      %p218 = por %p216, %p217
      %p219 = scmp.ne.s32.totalorder %s210, %s211
      %p220 = scmp.eq.s32.totalorder %s22, 0
      %p221 = por %p219, %p220
      %p222 = scmp.ne.s32.totalorder %s210, %s211
      %p223 = scmp.eq.s32.totalorder %s23, 1
      %p224 = por %p222, %p223
      %p226 = scmp.ne.s32.totalorder %s211, %s225
      %p227 = scmp.eq.s32.totalorder %s23, 0
      %p228 = por %p226, %p227
      %s230 = sadd.s32 %s229, 1
      %p233 = scmp.eq.s32.totalorder %s17, 1
      %p234 = scmp.ne.s32.totalorder %s229, %s231
      %p235 = scmp.eq.s32.totalorder %s17, 0
      %p236 = por %p234, %p235
      %p237 = scmp.ne.s32.totalorder %s229, %s231
      %p238 = scmp.eq.s32.totalorder %s22, 1
      %p239 = por %p237, %p238
      %p240 = scmp.ne.s32.totalorder %s231, %s232
      %p241 = scmp.eq.s32.totalorder %s22, 0
      %p242 = por %p240, %p241
      %p243 = scmp.ne.s32.totalorder %s231, %s232
      %p244 = scmp.eq.s32.totalorder %s23, 1
      %p245 = por %p243, %p244
      %p247 = scmp.ne.s32.totalorder %s232, %s246
      %p248 = scmp.eq.s32.totalorder %s23, 0
      %p249 = por %p247, %p248
      %s251 = sadd.s32 %s250, 1
      %p254 = scmp.eq.s32.totalorder %s17, 1
      %p255 = scmp.ne.s32.totalorder %s250, %s252
      %p256 = scmp.eq.s32.totalorder %s17, 0
      %p257 = por %p255, %p256
      %p258 = scmp.ne.s32.totalorder %s250, %s252
      %p259 = scmp.eq.s32.totalorder %s22, 1
      %p260 = por %p258, %p259
      %p261 = scmp.ne.s32.totalorder %s252, %s253
      %p262 = scmp.eq.s32.totalorder %s22, 0
      %p263 = por %p261, %p262
      %p264 = scmp.ne.s32.totalorder %s252, %s253
      %p265 = scmp.eq.s32.totalorder %s23, 1
      %p266 = por %p264, %p265
      %p268 = scmp.ne.s32.totalorder %s253, %s267
      %p269 = scmp.eq.s32.totalorder %s23, 0
      %p270 = por %p268, %p269
      %s271 = ssub.s32 %s17, %s24
      %p272 = scmp.eq.s32.totalorder %s271, 0
      %s274 = sadd.s32 %s273, 1
      %s275 = scalar_select %p272, %s273, %s274
      %p278 = pneg %p272
      %p279 = scmp.eq.s32.totalorder %s17, 1
      %p280 = por %p278, %p279
      %p281 = scmp.ne.s32.totalorder %s273, %s276
      %p282 = scmp.eq.s32.totalorder %s17, 0
      %p283 = por %p281, %p282
      %p284 = scmp.ne.s32.totalorder %s273, %s276
      %p285 = scmp.eq.s32.totalorder %s22, 1
      %p286 = por %p284, %p285
      %p287 = scmp.ne.s32.totalorder %s276, %s277
      %p288 = scmp.eq.s32.totalorder %s22, 0
      %p289 = por %p287, %p288
      %p290 = scmp.ne.s32.totalorder %s276, %s277
      %p291 = scmp.eq.s32.totalorder %s23, 1
      %p292 = por %p290, %p291
      %p294 = scmp.ne.s32.totalorder %s277, %s293
      %p295 = scmp.eq.s32.totalorder %s23, 0
      %p296 = por %p294, %p295
      %p297 = scmp.le.s32.totalorder 1, %s17
      %p298 = scmp.lt.s32.totalorder %s17, 3
      %p299 = pnand %p297, %p298
      %p300 = pneg %p299
      // Predicated region
      $region9: #{masked_mha_forward.2} parent=5 // pred_check
        _
      $region10: #{masked_mha_forward.2} parent=5 // pred_check_branch
        %302 = sbr.rel (%p299) target = $region12
      $region11: #{masked_mha_forward.2} parent=5 // pred_region
        %s303 = ssub.s32 %s17, 1
        // Predicated region
        $region13: #{masked_mha_forward.2} parent=11 // pred_check
          %p304 = pneg %p116
        $region14: #{masked_mha_forward.2} parent=11 // pred_check_branch
          %306 = sbr.rel (%p304) target = $region16
        $region15: #{masked_mha_forward.2} parent=11 // pred_region
          _
        $region16: #{masked_mha_forward.2} parent=11 // pred_fallthru
          _
        // Predicated region
        $region17: #{masked_mha_forward.2} parent=11 // pred_check
          %p307 = pneg %p137
        $region18: #{masked_mha_forward.2} parent=11 // pred_check_branch
          %309 = sbr.rel (%p307) target = $region20
        $region19: #{masked_mha_forward.2} parent=11 // pred_region
          _
        $region20: #{masked_mha_forward.2} parent=11 // pred_fallthru
          _
        // Predicated region
        $region21: #{masked_mha_forward.2} parent=11 // pred_check
          %p310 = pneg %p158
        $region22: #{masked_mha_forward.2} parent=11 // pred_check_branch
          %312 = sbr.rel (%p310) target = $region24
        $region23: #{masked_mha_forward.2} parent=11 // pred_region
          _
        $region24: #{masked_mha_forward.2} parent=11 // pred_fallthru
          _
        // Predicated region
        $region25: #{masked_mha_forward.2} parent=11 // pred_check
          %p313 = pneg %p179
        $region26: #{masked_mha_forward.2} parent=11 // pred_check_branch
          %315 = sbr.rel (%p313) target = $region28
        $region27: #{masked_mha_forward.2} parent=11 // pred_region
          _
        $region28: #{masked_mha_forward.2} parent=11 // pred_fallthru
          _
        // Predicated region
        $region29: #{masked_mha_forward.2} parent=11 // pred_check
          %p316 = pneg %p200
        $region30: #{masked_mha_forward.2} parent=11 // pred_check_branch
          %318 = sbr.rel (%p316) target = $region32
        $region31: #{masked_mha_forward.2} parent=11 // pred_region
          _
        $region32: #{masked_mha_forward.2} parent=11 // pred_fallthru
          _
        // Predicated region
        $region33: #{masked_mha_forward.2} parent=11 // pred_check
          %p319 = pneg %p221
        $region34: #{masked_mha_forward.2} parent=11 // pred_check_branch
          %321 = sbr.rel (%p319) target = $region36
        $region35: #{masked_mha_forward.2} parent=11 // pred_region
          _
        $region36: #{masked_mha_forward.2} parent=11 // pred_fallthru
          _
        // Predicated region
        $region37: #{masked_mha_forward.2} parent=11 // pred_check
          %p322 = pneg %p242
        $region38: #{masked_mha_forward.2} parent=11 // pred_check_branch
          %324 = sbr.rel (%p322) target = $region40
        $region39: #{masked_mha_forward.2} parent=11 // pred_region
          _
        $region40: #{masked_mha_forward.2} parent=11 // pred_fallthru
          _
        // Predicated region
        $region41: #{masked_mha_forward.2} parent=11 // pred_check
          %p325 = pneg %p263
        $region42: #{masked_mha_forward.2} parent=11 // pred_check_branch
          %327 = sbr.rel (%p325) target = $region44
        $region43: #{masked_mha_forward.2} parent=11 // pred_region
          _
        $region44: #{masked_mha_forward.2} parent=11 // pred_fallthru
          _
      $region12: #{masked_mha_forward.2} parent=5 // pred_fallthru
        _
      %p328 = scmp.lt.s32.totalorder %s17, 2
      // Predicated region
      $region45: #{masked_mha_forward.2} parent=5 // pred_check
        %p329 = pneg %p328
      $region46: #{masked_mha_forward.2} parent=5 // pred_check_branch
        %331 = sbr.rel (%p329) target = $region48
      $region47: #{masked_mha_forward.2} parent=5 // pred_region
        // Predicated region
        $region49: #{masked_mha_forward.2} parent=47 // pred_check
          %p332 = pneg %p37
        $region50: #{masked_mha_forward.2} parent=47 // pred_check_branch
          %334 = sbr.rel (%p332) target = $region52
        $region51: #{masked_mha_forward.2} parent=47 // pred_region
          %p335 = scmp.lt.s32.totalorder %s17, 1
          %s336 = scalar_select %p335, %s17, 1
          %s337 = smul.addr %s336, 8
          %s338 = scalar_lea.vmem %s0, %s337
        $region52: #{masked_mha_forward.2} parent=47 // pred_fallthru
          _
        // Predicated region
        $region53: #{masked_mha_forward.2} parent=47 // pred_check
          %p339 = pneg %p63
        $region54: #{masked_mha_forward.2} parent=47 // pred_check_branch
          %341 = sbr.rel (%p339) target = $region56
        $region55: #{masked_mha_forward.2} parent=47 // pred_region
          %p342 = scmp.lt.s32.totalorder %s17, 1
          %s343 = scalar_select %p342, %s17, 1
          %s344 = smul.addr %s343, 8
          %s345 = scalar_lea.vmem %s1, %s344
        $region56: #{masked_mha_forward.2} parent=47 // pred_fallthru
          _
        // Predicated region
        $region57: #{masked_mha_forward.2} parent=47 // pred_check
          %p346 = pneg %p89
        $region58: #{masked_mha_forward.2} parent=47 // pred_check_branch
          %348 = sbr.rel (%p346) target = $region60
        $region59: #{masked_mha_forward.2} parent=47 // pred_region
          %p349 = scmp.lt.s32.totalorder %s17, 1
          %s350 = scalar_select %p349, %s17, 1
          %s351 = smul.addr %s350, 8
          %s352 = scalar_lea.vmem %s2, %s351
        $region60: #{masked_mha_forward.2} parent=47 // pred_fallthru
          _
      $region48: #{masked_mha_forward.2} parent=5 // pred_fallthru
        _
      %p353 = scmp.le.s32.totalorder 1, %s17
      %p354 = scmp.lt.s32.totalorder %s17, 3
      %p355 = pnand %p353, %p354
      %p356 = pneg %p355
      // Predicated region
      $region61: #{masked_mha_forward.2} parent=5 // pred_check
        _
      $region62: #{masked_mha_forward.2} parent=5 // pred_check_branch
        %358 = sbr.rel (%p355) target = $region64
      $region63: #{masked_mha_forward.2} parent=5 // pred_region
        %s359 = ssub.s32 %s17, 1
        %p360 = scmp.lt.s32.totalorder %s22, 1
        %s361 = scalar_select %p360, %s22, 1
        %s362 = smul.addr %s361, 8
        %s363 = scalar_lea.vmem %s0, %s362
        %p364 = pneg %p43
        %p365 = pneg %p40
        %p366 = scmp.lt.s32.totalorder %s22, 1
        %s367 = scalar_select %p366, %s22, 1
        %s368 = smul.addr %s367, 8
        %s369 = scalar_lea.vmem %s1, %s368
        %p370 = pneg %p69
        %p371 = pneg %p66
        %p372 = scmp.lt.s32.totalorder %s22, 1
        %s373 = scalar_select %p372, %s22, 1
        %s374 = smul.addr %s373, 8
        %s375 = scalar_lea.vmem %s2, %s374
        %p376 = pneg %p95
        %p377 = pneg %p92
        %p378 = pneg %p116
        %p379 = pneg %p113
        %p380 = pneg %p137
        %p381 = pneg %p134
        %p382 = pneg %p158
        %p383 = pneg %p155
        %p384 = pneg %p179
        %p385 = pneg %p176
        %p386 = pneg %p200
        %p387 = pneg %p197
        %p388 = pneg %p221
        %p389 = pneg %p218
        %p390 = pneg %p242
        %p391 = pneg %p239
        %p392 = pneg %p263
        %p393 = pneg %p260
        %p394 = pneg %p289
        %p395 = pneg %p286
        %s396 = sand.u32 %s276, 1
        %s397 = sand.u32 %s276, 1
        %s398 = smul.addr %s397, 32
        %s399 = scalar_lea.vmem [#allocation2], %s398
        %p400 = scmp.lt.s32.totalorder %s22, 1
        %s401 = scalar_select %p400, %s22, 1
        %s402 = smul.addr %s401, 8
        %s403 = scalar_lea.vmem %s0, %s402
        %p404 = scmp.lt.s32.totalorder %s22, 1
        %s405 = scalar_select %p404, %s22, 1
        %s406 = smul.addr %s405, 8
        %s407 = scalar_lea.vmem %s1, %s406
        %p408 = scmp.lt.s32.totalorder %s22, 1
        %s409 = scalar_select %p408, %s22, 1
        %s410 = smul.addr %s409, 8
        %s411 = scalar_lea.vmem %s2, %s410
        %v412 = vld [vmem:[%s403] sm:$0xff]
        %v413 = vld [vmem:[%s3] sm:$0xff]
        %v414 = vld [vmem:[%s3 + $0x8] sm:$0xff]
        %v415 = vld [vmem:[%s3 + $0x10] sm:$0xff]
        %v416 = vld [vmem:[%s3 + $0x18] sm:$0xff]
        %v417 = vld [vmem:[%s4] sm:$0x1]
        %v419 = vlaneseq
        %v420 = vshrl.u32 %v419, 7
        %v421 = vsub.s32 0, %v420
        %v422 = vrot.slane %v417, %v421
        %vm424 = vcmask 261120
        %v426 = vsel %vm424, %v412, 0
        %428 = vmatprep.subr.mxu0 0.0
        %429 = vmatpush1.msra.mxu0 %v413
        %430 = vmatprep.subr.mxu0 0.0
        %431 = vmatpush1.msra.mxu0 %v414
        %432 = vmatprep.subr.mxu0 0.0
        %433 = vmatpush1.msra.mxu0 %v415
        %434 = vmatprep.subr.mxu0 0.0
        %435 = vmatpush1.msra.mxu0 %v416
        %436 = vmatprep.subr.mxu0 0.0
        %437 = vmatpush1.msra.mxu0 0.0
        %438 = vmatprep.subr.mxu0 0.0
        %439 = vmatpush1.msra.mxu0 0.0
        %440 = vmatprep.subr.mxu0 0.0
        %441 = vmatpush1.msra.mxu0 0.0
        %442 = vmatprep.subr.mxu0 0.0
        %443 = vmatpush1.msra.mxu0 0.0
        %444 = vmatprep.subr.mxu0 0.0
        %445 = vmatpush1.msra.mxu0 0.0
        %446 = vmatprep.subr.mxu0 0.0
        %447 = vmatpush1.msra.mxu0 0.0
        %448 = vmatprep.subr.mxu0 0.0
        %449 = vmatpush1.msra.mxu0 0.0
        %450 = vmatprep.subr.mxu0 0.0
        %451 = vmatpush1.msra.mxu0 0.0
        %452 = vmatprep.subr.mxu0 0.0
        %453 = vmatpush1.msra.mxu0 0.0
        %454 = vmatprep.subr.mxu0 0.0
        %455 = vmatpush1.msra.mxu0 0.0
        %456 = vmatprep.subr.mxu0 0.0
        %457 = vmatpush1.msra.mxu0 0.0
        %458 = vmatprep.subr.mxu0 0.0
        %459 = vmatpush1.msra.mxu0 0.0
        %460 = vmatprep.subr.mxu0 0.0
        %461 = vmatpush1.msra.mxu0 0.0
        %462 = vmatprep.subr.mxu0 0.0
        %463 = vmatpush1.msra.mxu0 0.0
        %464 = vmatprep.subr.mxu0 0.0
        %465 = vmatpush1.msra.mxu0 0.0
        %466 = vmatprep.subr.mxu0 0.0
        %467 = vmatpush1.msra.mxu0 0.0
        %468 = vmatprep.subr.mxu0 0.0
        %469 = vmatpush1.msra.mxu0 0.0
        %470 = vmatprep.subr.mxu0 0.0
        %471 = vmatpush1.msra.mxu0 0.0
        %472 = vmatprep.subr.mxu0 0.0
        %473 = vmatpush1.msra.mxu0 0.0
        %474 = vmatprep.subr.mxu0 0.0
        %475 = vmatpush1.msra.mxu0 0.0
        %476 = vmatprep.subr.mxu0 0.0
        %477 = vmatpush1.msra.mxu0 0.0
        %478 = vmatprep.subr.mxu0 0.0
        %479 = vmatpush1.msra.mxu0 0.0
        %480 = vmatprep.subr.mxu0 0.0
        %481 = vmatpush1.msra.mxu0 0.0
        %482 = vmatprep.subr.mxu0 0.0
        %483 = vmatpush1.msra.mxu0 0.0
        %484 = vmatprep.subr.mxu0 0.0
        %485 = vmatpush1.msra.mxu0 0.0
        %486 = vmatprep.subr.mxu0 0.0
        %487 = vmatpush1.msra.mxu0 0.0
        %488 = vmatprep.subr.mxu0 0.0
        %489 = vmatpush1.msra.mxu0 0.0
        %490 = vmatprep.subr.mxu0 0.0
        %491 = vmatpush1.msra.mxu0 0.0
        %492 = vmatprep.mubr.f32.mxu0 0.0
        %493 = vmatmul.mubr.f32.gmra.mrb[0].mxu0 %v426
        %v494 = vpop.f32.mrb[0].mxu0
        %v495 = vadd.f32 %v422, %v494
        %v496 = vpop.f32.mrb[0].mxu0
        %497 = vdwg.mxu0
        %v498 = vld [vmem:[%s407] sm:$0xff]
        %v499 = vld [vmem:[%s5] sm:$0xff]
        %v500 = vld [vmem:[%s5 + $0x8] sm:$0xff]
        %v501 = vld [vmem:[%s5 + $0x10] sm:$0xff]
        %v502 = vld [vmem:[%s5 + $0x18] sm:$0xff]
        %v503 = vld [vmem:[%s6] sm:$0x1]
        %v505 = vlaneseq
        %v506 = vshrl.u32 %v505, 7
        %v507 = vsub.s32 0, %v506
        %v508 = vrot.slane %v503, %v507
        %v511 = vsel %vm424, %v498, 0
        %513 = vmatprep.subr.mxu0 0.0
        %514 = vmatpush1.msra.mxu0 %v499
        %515 = vmatprep.subr.mxu0 0.0
        %516 = vmatpush1.msra.mxu0 %v500
        %517 = vmatprep.subr.mxu0 0.0
        %518 = vmatpush1.msra.mxu0 %v501
        %519 = vmatprep.subr.mxu0 0.0
        %520 = vmatpush1.msra.mxu0 %v502
        %521 = vmatprep.subr.mxu0 0.0
        %522 = vmatpush1.msra.mxu0 0.0
        %523 = vmatprep.subr.mxu0 0.0
        %524 = vmatpush1.msra.mxu0 0.0
        %525 = vmatprep.subr.mxu0 0.0
        %526 = vmatpush1.msra.mxu0 0.0
        %527 = vmatprep.subr.mxu0 0.0
        %528 = vmatpush1.msra.mxu0 0.0
        %529 = vmatprep.subr.mxu0 0.0
        %530 = vmatpush1.msra.mxu0 0.0
        %531 = vmatprep.subr.mxu0 0.0
        %532 = vmatpush1.msra.mxu0 0.0
        %533 = vmatprep.subr.mxu0 0.0
        %534 = vmatpush1.msra.mxu0 0.0
        %535 = vmatprep.subr.mxu0 0.0
        %536 = vmatpush1.msra.mxu0 0.0
        %537 = vmatprep.subr.mxu0 0.0
        %538 = vmatpush1.msra.mxu0 0.0
        %539 = vmatprep.subr.mxu0 0.0
        %540 = vmatpush1.msra.mxu0 0.0
        %541 = vmatprep.subr.mxu0 0.0
        %542 = vmatpush1.msra.mxu0 0.0
        %543 = vmatprep.subr.mxu0 0.0
        %544 = vmatpush1.msra.mxu0 0.0
        %545 = vmatprep.subr.mxu0 0.0
        %546 = vmatpush1.msra.mxu0 0.0
        %547 = vmatprep.subr.mxu0 0.0
        %548 = vmatpush1.msra.mxu0 0.0
        %549 = vmatprep.subr.mxu0 0.0
        %550 = vmatpush1.msra.mxu0 0.0
        %551 = vmatprep.subr.mxu0 0.0
        %552 = vmatpush1.msra.mxu0 0.0
        %553 = vmatprep.subr.mxu0 0.0
        %554 = vmatpush1.msra.mxu0 0.0
        %555 = vmatprep.subr.mxu0 0.0
        %556 = vmatpush1.msra.mxu0 0.0
        %557 = vmatprep.subr.mxu0 0.0
        %558 = vmatpush1.msra.mxu0 0.0
        %559 = vmatprep.subr.mxu0 0.0
        %560 = vmatpush1.msra.mxu0 0.0
        %561 = vmatprep.subr.mxu0 0.0
        %562 = vmatpush1.msra.mxu0 0.0
        %563 = vmatprep.subr.mxu0 0.0
        %564 = vmatpush1.msra.mxu0 0.0
        %565 = vmatprep.subr.mxu0 0.0
        %566 = vmatpush1.msra.mxu0 0.0
        %567 = vmatprep.subr.mxu0 0.0
        %568 = vmatpush1.msra.mxu0 0.0
        %569 = vmatprep.subr.mxu0 0.0
        %570 = vmatpush1.msra.mxu0 0.0
        %571 = vmatprep.subr.mxu0 0.0
        %572 = vmatpush1.msra.mxu0 0.0
        %573 = vmatprep.subr.mxu0 0.0
        %574 = vmatpush1.msra.mxu0 0.0
        %575 = vmatprep.subr.mxu0 0.0
        %576 = vmatpush1.msra.mxu0 0.0
        %577 = vmatprep.mubr.f32.mxu0 0.0
        %578 = vmatmul.mubr.f32.gmra.mrb[0].mxu0 %v511
        %v579 = vpop.f32.mrb[0].mxu0
        %v580 = vadd.f32 %v508, %v579
        %v581 = vpop.f32.mrb[0].mxu0
        %582 = vdwg.mxu0
        %v583 = vld [vmem:[%s411] sm:$0xff]
        %v584 = vld [vmem:[%s7] sm:$0xff]
        %v585 = vld [vmem:[%s7 + $0x8] sm:$0xff]
        %v586 = vld [vmem:[%s7 + $0x10] sm:$0xff]
        %v587 = vld [vmem:[%s7 + $0x18] sm:$0xff]
        %v588 = vld [vmem:[%s8] sm:$0x1]
        %v590 = vlaneseq
        %v591 = vshrl.u32 %v590, 7
        %v592 = vsub.s32 0, %v591
        %v593 = vrot.slane %v588, %v592
        %v596 = vsel %vm424, %v583, 0
        %598 = vmatprep.subr.mxu0 0.0
        %599 = vmatpush1.msra.mxu0 %v584
        %600 = vmatprep.subr.mxu0 0.0
        %601 = vmatpush1.msra.mxu0 %v585
        %602 = vmatprep.subr.mxu0 0.0
        %603 = vmatpush1.msra.mxu0 %v586
        %604 = vmatprep.subr.mxu0 0.0
        %605 = vmatpush1.msra.mxu0 %v587
        %606 = vmatprep.subr.mxu0 0.0
        %607 = vmatpush1.msra.mxu0 0.0
        %608 = vmatprep.subr.mxu0 0.0
        %609 = vmatpush1.msra.mxu0 0.0
        %610 = vmatprep.subr.mxu0 0.0
        %611 = vmatpush1.msra.mxu0 0.0
        %612 = vmatprep.subr.mxu0 0.0
        %613 = vmatpush1.msra.mxu0 0.0
        %614 = vmatprep.subr.mxu0 0.0
        %615 = vmatpush1.msra.mxu0 0.0
        %616 = vmatprep.subr.mxu0 0.0
        %617 = vmatpush1.msra.mxu0 0.0
        %618 = vmatprep.subr.mxu0 0.0
        %619 = vmatpush1.msra.mxu0 0.0
        %620 = vmatprep.subr.mxu0 0.0
        %621 = vmatpush1.msra.mxu0 0.0
        %622 = vmatprep.subr.mxu0 0.0
        %623 = vmatpush1.msra.mxu0 0.0
        %624 = vmatprep.subr.mxu0 0.0
        %625 = vmatpush1.msra.mxu0 0.0
        %626 = vmatprep.subr.mxu0 0.0
        %627 = vmatpush1.msra.mxu0 0.0
        %628 = vmatprep.subr.mxu0 0.0
        %629 = vmatpush1.msra.mxu0 0.0
        %630 = vmatprep.subr.mxu0 0.0
        %631 = vmatpush1.msra.mxu0 0.0
        %632 = vmatprep.subr.mxu0 0.0
        %633 = vmatpush1.msra.mxu0 0.0
        %634 = vmatprep.subr.mxu0 0.0
        %635 = vmatpush1.msra.mxu0 0.0
        %636 = vmatprep.subr.mxu0 0.0
        %637 = vmatpush1.msra.mxu0 0.0
        %638 = vmatprep.subr.mxu0 0.0
        %639 = vmatpush1.msra.mxu0 0.0
        %640 = vmatprep.subr.mxu0 0.0
        %641 = vmatpush1.msra.mxu0 0.0
        %642 = vmatprep.subr.mxu0 0.0
        %643 = vmatpush1.msra.mxu0 0.0
        %644 = vmatprep.subr.mxu0 0.0
        %645 = vmatpush1.msra.mxu0 0.0
        %646 = vmatprep.subr.mxu0 0.0
        %647 = vmatpush1.msra.mxu0 0.0
        %648 = vmatprep.subr.mxu0 0.0
        %649 = vmatpush1.msra.mxu0 0.0
        %650 = vmatprep.subr.mxu0 0.0
        %651 = vmatpush1.msra.mxu0 0.0
        %652 = vmatprep.subr.mxu0 0.0
        %653 = vmatpush1.msra.mxu0 0.0
        %654 = vmatprep.subr.mxu0 0.0
        %655 = vmatpush1.msra.mxu0 0.0
        %656 = vmatprep.subr.mxu0 0.0
        %657 = vmatpush1.msra.mxu0 0.0
        %658 = vmatprep.subr.mxu0 0.0
        %659 = vmatpush1.msra.mxu0 0.0
        %660 = vmatprep.subr.mxu0 0.0
        %661 = vmatpush1.msra.mxu0 0.0
        %662 = vmatprep.mubr.f32.mxu0 0.0
        %663 = vmatmul.mubr.f32.gmra.mrb[0].mxu0 %v596
        %v664 = vpop.f32.mrb[0].mxu0
        %v665 = vadd.f32 %v593, %v664
        %v666 = vpop.f32.mrb[0].mxu0
        %667 = vdwg.mxu0
        %v668 = vld [vmem:[%s9] sm:$0xff]
        %v669 = vld [vmem:[%s9 + $0x8] sm:$0xff]
        %v670 = vld [vmem:[%s10] sm:$0x1]
        %v672 = vlaneseq
        %v673 = vshrl.u32 %v672, 7
        %v674 = vsub.s32 0, %v673
        %v675 = vrot.slane %v670, %v674
        %vm677 = vcmask 130048
        %v679 = vsel %vm677, %v665, 0
        %681 = vmatprep.subr.mxu0 0.0
        %682 = vmatpush1.msra.mxu0 %v668
        %683 = vmatprep.subr.mxu0 0.0
        %684 = vmatpush1.msra.mxu0 %v669
        %685 = vmatprep.subr.mxu0 0.0
        %686 = vmatpush1.msra.mxu0 0.0
        %687 = vmatprep.subr.mxu0 0.0
        %688 = vmatpush1.msra.mxu0 0.0
        %689 = vmatprep.subr.mxu0 0.0
        %690 = vmatpush1.msra.mxu0 0.0
        %691 = vmatprep.subr.mxu0 0.0
        %692 = vmatpush1.msra.mxu0 0.0
        %693 = vmatprep.subr.mxu0 0.0
        %694 = vmatpush1.msra.mxu0 0.0
        %695 = vmatprep.subr.mxu0 0.0
        %696 = vmatpush1.msra.mxu0 0.0
        %697 = vmatprep.subr.mxu0 0.0
        %698 = vmatpush1.msra.mxu0 0.0
        %699 = vmatprep.subr.mxu0 0.0
        %700 = vmatpush1.msra.mxu0 0.0
        %701 = vmatprep.subr.mxu0 0.0
        %702 = vmatpush1.msra.mxu0 0.0
        %703 = vmatprep.subr.mxu0 0.0
        %704 = vmatpush1.msra.mxu0 0.0
        %705 = vmatprep.subr.mxu0 0.0
        %706 = vmatpush1.msra.mxu0 0.0
        %707 = vmatprep.subr.mxu0 0.0
        %708 = vmatpush1.msra.mxu0 0.0
        %709 = vmatprep.subr.mxu0 0.0
        %710 = vmatpush1.msra.mxu0 0.0
        %711 = vmatprep.subr.mxu0 0.0
        %712 = vmatpush1.msra.mxu0 0.0
        %713 = vmatprep.subr.mxu0 0.0
        %714 = vmatpush1.msra.mxu0 0.0
        %715 = vmatprep.subr.mxu0 0.0
        %716 = vmatpush1.msra.mxu0 0.0
        %717 = vmatprep.subr.mxu0 0.0
        %718 = vmatpush1.msra.mxu0 0.0
        %719 = vmatprep.subr.mxu0 0.0
        %720 = vmatpush1.msra.mxu0 0.0
        %721 = vmatprep.subr.mxu0 0.0
        %722 = vmatpush1.msra.mxu0 0.0
        %723 = vmatprep.subr.mxu0 0.0
        %724 = vmatpush1.msra.mxu0 0.0
        %725 = vmatprep.subr.mxu0 0.0
        %726 = vmatpush1.msra.mxu0 0.0
        %727 = vmatprep.subr.mxu0 0.0
        %728 = vmatpush1.msra.mxu0 0.0
        %729 = vmatprep.subr.mxu0 0.0
        %730 = vmatpush1.msra.mxu0 0.0
        %731 = vmatprep.subr.mxu0 0.0
        %732 = vmatpush1.msra.mxu0 0.0
        %733 = vmatprep.subr.mxu0 0.0
        %734 = vmatpush1.msra.mxu0 0.0
        %735 = vmatprep.subr.mxu0 0.0
        %736 = vmatpush1.msra.mxu0 0.0
        %737 = vmatprep.subr.mxu0 0.0
        %738 = vmatpush1.msra.mxu0 0.0
        %739 = vmatprep.subr.mxu0 0.0
        %740 = vmatpush1.msra.mxu0 0.0
        %741 = vmatprep.subr.mxu0 0.0
        %742 = vmatpush1.msra.mxu0 0.0
        %743 = vmatprep.subr.mxu0 0.0
        %744 = vmatpush1.msra.mxu0 0.0
        %745 = vmatprep.mubr.f32.mxu0 0.0
        %746 = vmatmul.mubr.f32.gmra.mrb[0].mxu0 %v679
        %v747 = vpop.f32.mrb[0].mxu0
        %v748 = vadd.f32 %v675, %v747
        %v749 = vpop.f32.mrb[0].mxu0
        %750 = vdwg.mxu0
        %v751 = vlaneseq
        %v752 = vshrl.u32 %v751, 7
        %v753 = vlaneseq
        %v754 = vand.u32 %v753, 127
        %vm755 = vcmp.le.s32.totalorder %v754, %v752
        %vm756 = vcmask 31744
        %v758 = vsel %vm756, %v495, 0
        %v761 = vsel %vm756, %v580, 0
        %763 = vmatprep.subr.mxu0 0.0
        %764 = vmatpush1.xpose.msra.mxu0 %v761
        %765 = vmatprep.subr.mxu0 0.0
        %766 = vmatpush1.xpose.msra.mxu0 0.0
        %767 = vmatprep.subr.mxu0 0.0
        %768 = vmatpush1.xpose.msra.mxu0 0.0
        %769 = vmatprep.subr.mxu0 0.0
        %770 = vmatpush1.xpose.msra.mxu0 0.0
        %771 = vmatprep.subr.mxu0 0.0
        %772 = vmatpush1.xpose.msra.mxu0 0.0
        %773 = vmatprep.subr.mxu0 0.0
        %774 = vmatpush1.xpose.msra.mxu0 0.0
        %775 = vmatprep.subr.mxu0 0.0
        %776 = vmatpush1.xpose.msra.mxu0 0.0
        %777 = vmatprep.subr.mxu0 0.0
        %778 = vmatpush1.xpose.msra.mxu0 0.0
        %779 = vmatprep.subr.mxu0 0.0
        %780 = vmatpush1.xpose.msra.mxu0 0.0
        %781 = vmatprep.subr.mxu0 0.0
        %782 = vmatpush1.xpose.msra.mxu0 0.0
        %783 = vmatprep.subr.mxu0 0.0
        %784 = vmatpush1.xpose.msra.mxu0 0.0
        %785 = vmatprep.subr.mxu0 0.0
        %786 = vmatpush1.xpose.msra.mxu0 0.0
        %787 = vmatprep.subr.mxu0 0.0
        %788 = vmatpush1.xpose.msra.mxu0 0.0
        %789 = vmatprep.subr.mxu0 0.0
        %790 = vmatpush1.xpose.msra.mxu0 0.0
        %791 = vmatprep.subr.mxu0 0.0
        %792 = vmatpush1.xpose.msra.mxu0 0.0
        %793 = vmatprep.subr.mxu0 0.0
        %794 = vmatpush1.xpose.msra.mxu0 0.0
        %795 = vmatprep.subr.mxu0 0.0
        %796 = vmatpush1.xpose.msra.mxu0 0.0
        %797 = vmatprep.subr.mxu0 0.0
        %798 = vmatpush1.xpose.msra.mxu0 0.0
        %799 = vmatprep.subr.mxu0 0.0
        %800 = vmatpush1.xpose.msra.mxu0 0.0
        %801 = vmatprep.subr.mxu0 0.0
        %802 = vmatpush1.xpose.msra.mxu0 0.0
        %803 = vmatprep.subr.mxu0 0.0
        %804 = vmatpush1.xpose.msra.mxu0 0.0
        %805 = vmatprep.subr.mxu0 0.0
        %806 = vmatpush1.xpose.msra.mxu0 0.0
        %807 = vmatprep.subr.mxu0 0.0
        %808 = vmatpush1.xpose.msra.mxu0 0.0
        %809 = vmatprep.subr.mxu0 0.0
        %810 = vmatpush1.xpose.msra.mxu0 0.0
        %811 = vmatprep.subr.mxu0 0.0
        %812 = vmatpush1.xpose.msra.mxu0 0.0
        %813 = vmatprep.subr.mxu0 0.0
        %814 = vmatpush1.xpose.msra.mxu0 0.0
        %815 = vmatprep.subr.mxu0 0.0
        %816 = vmatpush1.xpose.msra.mxu0 0.0
        %817 = vmatprep.subr.mxu0 0.0
        %818 = vmatpush1.xpose.msra.mxu0 0.0
        %819 = vmatprep.subr.mxu0 0.0
        %820 = vmatpush1.xpose.msra.mxu0 0.0
        %821 = vmatprep.subr.mxu0 0.0
        %822 = vmatpush1.xpose.msra.mxu0 0.0
        %823 = vmatprep.subr.mxu0 0.0
        %824 = vmatpush1.xpose.msra.mxu0 0.0
        %825 = vmatprep.subr.mxu0 0.0
        %826 = vmatpush1.xpose.msra.mxu0 0.0
        %827 = vmatprep.mubr.f32.mxu0 0.0
        %828 = vmatmul.mubr.f32.gmra.mrb[0].mxu0 %v758
        %v829 = vpop.f32.mrb[0].mxu0
        %v830 = vadd.f32 0.0, %v829
        %v831 = vpop.f32.mrb[0].mxu0
        %832 = vdwg.mxu0
        %v833 = vsel %vm755, %v830, -inf
        %vm834 = vcmask 64512
        %v835 = vsel %vm834, %v833, -inf
        %836 = vmax.xlane.f32.xlu0 %v835
        %v837 = vpop.xlane.xlu0 %836
        %v838 = vsub.f32 %v833, %v837
        %v839 = vmul.f32 %v838, 1.442695
        %v840 = vpow.pop %v839
        %v841 = vsel %vm834, %v840, 0.0
        %842 = vadd.xlane.f32.xlu0 %v841
        %v843 = vpop.xlane.xlu0 %842
        %v844 = vrcp.pop %v843
        %v845 = vmul.f32 %v840, %v844
        %v847 = vsel %vm834, %v845, 0
        %849 = vmatprep.subr.mxu0 0.0
        %850 = vmatpush1.msra.mxu0 %v748
        %851 = vmatprep.subr.mxu0 0.0
        %852 = vmatpush1.msra.mxu0 0.0
        %853 = vmatprep.subr.mxu0 0.0
        %854 = vmatpush1.msra.mxu0 0.0
        %855 = vmatprep.subr.mxu0 0.0
        %856 = vmatpush1.msra.mxu0 0.0
        %857 = vmatprep.subr.mxu0 0.0
        %858 = vmatpush1.msra.mxu0 0.0
        %859 = vmatprep.subr.mxu0 0.0
        %860 = vmatpush1.msra.mxu0 0.0
        %861 = vmatprep.subr.mxu0 0.0
        %862 = vmatpush1.msra.mxu0 0.0
        %863 = vmatprep.subr.mxu0 0.0
        %864 = vmatpush1.msra.mxu0 0.0
        %865 = vmatprep.subr.mxu0 0.0
        %866 = vmatpush1.msra.mxu0 0.0
        %867 = vmatprep.subr.mxu0 0.0
        %868 = vmatpush1.msra.mxu0 0.0
        %869 = vmatprep.subr.mxu0 0.0
        %870 = vmatpush1.msra.mxu0 0.0
        %871 = vmatprep.subr.mxu0 0.0
        %872 = vmatpush1.msra.mxu0 0.0
        %873 = vmatprep.subr.mxu0 0.0
        %874 = vmatpush1.msra.mxu0 0.0
        %875 = vmatprep.subr.mxu0 0.0
        %876 = vmatpush1.msra.mxu0 0.0
        %877 = vmatprep.subr.mxu0 0.0
        %878 = vmatpush1.msra.mxu0 0.0
        %879 = vmatprep.subr.mxu0 0.0
        %880 = vmatpush1.msra.mxu0 0.0
        %881 = vmatprep.subr.mxu0 0.0
        %882 = vmatpush1.msra.mxu0 0.0
        %883 = vmatprep.subr.mxu0 0.0
        %884 = vmatpush1.msra.mxu0 0.0
        %885 = vmatprep.subr.mxu0 0.0
        %886 = vmatpush1.msra.mxu0 0.0
        %887 = vmatprep.subr.mxu0 0.0
        %888 = vmatpush1.msra.mxu0 0.0
        %889 = vmatprep.subr.mxu0 0.0
        %890 = vmatpush1.msra.mxu0 0.0
        %891 = vmatprep.subr.mxu0 0.0
        %892 = vmatpush1.msra.mxu0 0.0
        %893 = vmatprep.subr.mxu0 0.0
        %894 = vmatpush1.msra.mxu0 0.0
        %895 = vmatprep.subr.mxu0 0.0
        %896 = vmatpush1.msra.mxu0 0.0
        %897 = vmatprep.subr.mxu0 0.0
        %898 = vmatpush1.msra.mxu0 0.0
        %899 = vmatprep.subr.mxu0 0.0
        %900 = vmatpush1.msra.mxu0 0.0
        %901 = vmatprep.subr.mxu0 0.0
        %902 = vmatpush1.msra.mxu0 0.0
        %903 = vmatprep.subr.mxu0 0.0
        %904 = vmatpush1.msra.mxu0 0.0
        %905 = vmatprep.subr.mxu0 0.0
        %906 = vmatpush1.msra.mxu0 0.0
        %907 = vmatprep.subr.mxu0 0.0
        %908 = vmatpush1.msra.mxu0 0.0
        %909 = vmatprep.subr.mxu0 0.0
        %910 = vmatpush1.msra.mxu0 0.0
        %911 = vmatprep.subr.mxu0 0.0
        %912 = vmatpush1.msra.mxu0 0.0
        %913 = vmatprep.mubr.f32.mxu0 0.0
        %914 = vmatmul.mubr.f32.gmra.mrb[0].mxu0 %v847
        %v915 = vpop.f32.mrb[0].mxu0
        %v916 = vadd.f32 0.0, %v915
        %v917 = vpop.f32.mrb[0].mxu0
        %918 = vdwg.mxu0
        %919 = vst.msk [vmem:[%s399] sm:$0xff] %vm834, %v916
        %920 = vrot.lane.b32.xlu0 %v495, 124
        %v921 = vpop.permute.xlu0 %920
        %922 = vrot.lane.b32.xlu0 %v580, 124
        %v923 = vpop.permute.xlu0 %922
        %v924 = vsel %vm756, %v921, 0
        %v926 = vsel %vm756, %v923, 0
        %928 = vmatprep.subr.mxu0 0.0
        %929 = vmatpush1.xpose.msra.mxu0 %v926
        %930 = vmatprep.subr.mxu0 0.0
        %931 = vmatpush1.xpose.msra.mxu0 0.0
        %932 = vmatprep.subr.mxu0 0.0
        %933 = vmatpush1.xpose.msra.mxu0 0.0
        %934 = vmatprep.subr.mxu0 0.0
        %935 = vmatpush1.xpose.msra.mxu0 0.0
        %936 = vmatprep.subr.mxu0 0.0
        %937 = vmatpush1.xpose.msra.mxu0 0.0
        %938 = vmatprep.subr.mxu0 0.0
        %939 = vmatpush1.xpose.msra.mxu0 0.0
        %940 = vmatprep.subr.mxu0 0.0
        %941 = vmatpush1.xpose.msra.mxu0 0.0
        %942 = vmatprep.subr.mxu0 0.0
        %943 = vmatpush1.xpose.msra.mxu0 0.0
        %944 = vmatprep.subr.mxu0 0.0
        %945 = vmatpush1.xpose.msra.mxu0 0.0
        %946 = vmatprep.subr.mxu0 0.0
        %947 = vmatpush1.xpose.msra.mxu0 0.0
        %948 = vmatprep.subr.mxu0 0.0
        %949 = vmatpush1.xpose.msra.mxu0 0.0
        %950 = vmatprep.subr.mxu0 0.0
        %951 = vmatpush1.xpose.msra.mxu0 0.0
        %952 = vmatprep.subr.mxu0 0.0
        %953 = vmatpush1.xpose.msra.mxu0 0.0
        %954 = vmatprep.subr.mxu0 0.0
        %955 = vmatpush1.xpose.msra.mxu0 0.0
        %956 = vmatprep.subr.mxu0 0.0
        %957 = vmatpush1.xpose.msra.mxu0 0.0
        %958 = vmatprep.subr.mxu0 0.0
        %959 = vmatpush1.xpose.msra.mxu0 0.0
        %960 = vmatprep.subr.mxu0 0.0
        %961 = vmatpush1.xpose.msra.mxu0 0.0
        %962 = vmatprep.subr.mxu0 0.0
        %963 = vmatpush1.xpose.msra.mxu0 0.0
        %964 = vmatprep.subr.mxu0 0.0
        %965 = vmatpush1.xpose.msra.mxu0 0.0
        %966 = vmatprep.subr.mxu0 0.0
        %967 = vmatpush1.xpose.msra.mxu0 0.0
        %968 = vmatprep.subr.mxu0 0.0
        %969 = vmatpush1.xpose.msra.mxu0 0.0
        %970 = vmatprep.subr.mxu0 0.0
        %971 = vmatpush1.xpose.msra.mxu0 0.0
        %972 = vmatprep.subr.mxu0 0.0
        %973 = vmatpush1.xpose.msra.mxu0 0.0
        %974 = vmatprep.subr.mxu0 0.0
        %975 = vmatpush1.xpose.msra.mxu0 0.0
        %976 = vmatprep.subr.mxu0 0.0
        %977 = vmatpush1.xpose.msra.mxu0 0.0
        %978 = vmatprep.subr.mxu0 0.0
        %979 = vmatpush1.xpose.msra.mxu0 0.0
        %980 = vmatprep.subr.mxu0 0.0
        %981 = vmatpush1.xpose.msra.mxu0 0.0
        %982 = vmatprep.subr.mxu0 0.0
        %983 = vmatpush1.xpose.msra.mxu0 0.0
        %984 = vmatprep.subr.mxu0 0.0
        %985 = vmatpush1.xpose.msra.mxu0 0.0
        %986 = vmatprep.subr.mxu0 0.0
        %987 = vmatpush1.xpose.msra.mxu0 0.0
        %988 = vmatprep.subr.mxu0 0.0
        %989 = vmatpush1.xpose.msra.mxu0 0.0
        %990 = vmatprep.subr.mxu0 0.0
        %991 = vmatpush1.xpose.msra.mxu0 0.0
        %992 = vmatprep.mubr.f32.mxu0 0.0
        %993 = vmatmul.mubr.f32.gmra.mrb[0].mxu0 %v924
        %v994 = vpop.f32.mrb[0].mxu0
        %v995 = vadd.f32 0.0, %v994
        %v996 = vpop.f32.mrb[0].mxu0
        %997 = vdwg.mxu0
        %v998 = vsel %vm755, %v995, -inf
        %v999 = vsel %vm834, %v998, -inf
        %1000 = vmax.xlane.f32.xlu0 %v999
        %v1001 = vpop.xlane.xlu0 %1000
        %v1002 = vsub.f32 %v998, %v1001
        %v1003 = vmul.f32 %v1002, 1.442695
        %v1004 = vpow.pop %v1003
        %v1005 = vsel %vm834, %v1004, 0.0
        %1006 = vadd.xlane.f32.xlu0 %v1005
        %v1007 = vpop.xlane.xlu0 %1006
        %v1008 = vrcp.pop %v1007
        %v1009 = vmul.f32 %v1004, %v1008
        %1011 = vrot.lane.b32.xlu0 %v748, 120
        %v1012 = vpop.permute.xlu0 %1011
        %v1015 = vsel %vm834, %v1009, 0
        %1017 = vmatprep.subr.mxu0 0.0
        %1018 = vmatpush1.msra.mxu0 %v1012
        %1019 = vmatprep.subr.mxu0 0.0
        %1020 = vmatpush1.msra.mxu0 0.0
        %1021 = vmatprep.subr.mxu0 0.0
        %1022 = vmatpush1.msra.mxu0 0.0
        %1023 = vmatprep.subr.mxu0 0.0
        %1024 = vmatpush1.msra.mxu0 0.0
        %1025 = vmatprep.subr.mxu0 0.0
        %1026 = vmatpush1.msra.mxu0 0.0
        %1027 = vmatprep.subr.mxu0 0.0
        %1028 = vmatpush1.msra.mxu0 0.0
        %1029 = vmatprep.subr.mxu0 0.0
        %1030 = vmatpush1.msra.mxu0 0.0
        %1031 = vmatprep.subr.mxu0 0.0
        %1032 = vmatpush1.msra.mxu0 0.0
        %1033 = vmatprep.subr.mxu0 0.0
        %1034 = vmatpush1.msra.mxu0 0.0
        %1035 = vmatprep.subr.mxu0 0.0
        %1036 = vmatpush1.msra.mxu0 0.0
        %1037 = vmatprep.subr.mxu0 0.0
        %1038 = vmatpush1.msra.mxu0 0.0
        %1039 = vmatprep.subr.mxu0 0.0
        %1040 = vmatpush1.msra.mxu0 0.0
        %1041 = vmatprep.subr.mxu0 0.0
        %1042 = vmatpush1.msra.mxu0 0.0
        %1043 = vmatprep.subr.mxu0 0.0
        %1044 = vmatpush1.msra.mxu0 0.0
        %1045 = vmatprep.subr.mxu0 0.0
        %1046 = vmatpush1.msra.mxu0 0.0
        %1047 = vmatprep.subr.mxu0 0.0
        %1048 = vmatpush1.msra.mxu0 0.0
        %1049 = vmatprep.subr.mxu0 0.0
        %1050 = vmatpush1.msra.mxu0 0.0
        %1051 = vmatprep.subr.mxu0 0.0
        %1052 = vmatpush1.msra.mxu0 0.0
        %1053 = vmatprep.subr.mxu0 0.0
        %1054 = vmatpush1.msra.mxu0 0.0
        %1055 = vmatprep.subr.mxu0 0.0
        %1056 = vmatpush1.msra.mxu0 0.0
        %1057 = vmatprep.subr.mxu0 0.0
        %1058 = vmatpush1.msra.mxu0 0.0
        %1059 = vmatprep.subr.mxu0 0.0
        %1060 = vmatpush1.msra.mxu0 0.0
        %1061 = vmatprep.subr.mxu0 0.0
        %1062 = vmatpush1.msra.mxu0 0.0
        %1063 = vmatprep.subr.mxu0 0.0
        %1064 = vmatpush1.msra.mxu0 0.0
        %1065 = vmatprep.subr.mxu0 0.0
        %1066 = vmatpush1.msra.mxu0 0.0
        %1067 = vmatprep.subr.mxu0 0.0
        %1068 = vmatpush1.msra.mxu0 0.0
        %1069 = vmatprep.subr.mxu0 0.0
        %1070 = vmatpush1.msra.mxu0 0.0
        %1071 = vmatprep.subr.mxu0 0.0
        %1072 = vmatpush1.msra.mxu0 0.0
        %1073 = vmatprep.subr.mxu0 0.0
        %1074 = vmatpush1.msra.mxu0 0.0
        %1075 = vmatprep.subr.mxu0 0.0
        %1076 = vmatpush1.msra.mxu0 0.0
        %1077 = vmatprep.subr.mxu0 0.0
        %1078 = vmatpush1.msra.mxu0 0.0
        %1079 = vmatprep.subr.mxu0 0.0
        %1080 = vmatpush1.msra.mxu0 0.0
        %1081 = vmatprep.mubr.f32.mxu0 0.0
        %1082 = vmatmul.mubr.f32.gmra.mrb[0].mxu0 %v1015
        %v1083 = vpop.f32.mrb[0].mxu0
        %v1084 = vadd.f32 0.0, %v1083
        %v1085 = vpop.f32.mrb[0].mxu0
        %1086 = vdwg.mxu0
        %s1087 = scalar_lea.vmem %s399, 8 [#allocation2]
        %1088 = vst.msk [vmem:[%s1087] sm:$0xff] %vm834, %v1084
        %1089 = vrot.lane.b32.xlu0 %v495, 120
        %v1090 = vpop.permute.xlu0 %1089
        %1091 = vrot.lane.b32.xlu0 %v580, 120
        %v1092 = vpop.permute.xlu0 %1091
        %v1093 = vsel %vm756, %v1090, 0
        %v1095 = vsel %vm756, %v1092, 0
        %1097 = vmatprep.subr.mxu0 0.0
        %1098 = vmatpush1.xpose.msra.mxu0 %v1095
        %1099 = vmatprep.subr.mxu0 0.0
        %1100 = vmatpush1.xpose.msra.mxu0 0.0
        %1101 = vmatprep.subr.mxu0 0.0
        %1102 = vmatpush1.xpose.msra.mxu0 0.0
        %1103 = vmatprep.subr.mxu0 0.0
        %1104 = vmatpush1.xpose.msra.mxu0 0.0
        %1105 = vmatprep.subr.mxu0 0.0
        %1106 = vmatpush1.xpose.msra.mxu0 0.0
        %1107 = vmatprep.subr.mxu0 0.0
        %1108 = vmatpush1.xpose.msra.mxu0 0.0
        %1109 = vmatprep.subr.mxu0 0.0
        %1110 = vmatpush1.xpose.msra.mxu0 0.0
        %1111 = vmatprep.subr.mxu0 0.0
        %1112 = vmatpush1.xpose.msra.mxu0 0.0
        %1113 = vmatprep.subr.mxu0 0.0
        %1114 = vmatpush1.xpose.msra.mxu0 0.0
        %1115 = vmatprep.subr.mxu0 0.0
        %1116 = vmatpush1.xpose.msra.mxu0 0.0
        %1117 = vmatprep.subr.mxu0 0.0
        %1118 = vmatpush1.xpose.msra.mxu0 0.0
        %1119 = vmatprep.subr.mxu0 0.0
        %1120 = vmatpush1.xpose.msra.mxu0 0.0
        %1121 = vmatprep.subr.mxu0 0.0
        %1122 = vmatpush1.xpose.msra.mxu0 0.0
        %1123 = vmatprep.subr.mxu0 0.0
        %1124 = vmatpush1.xpose.msra.mxu0 0.0
        %1125 = vmatprep.subr.mxu0 0.0
        %1126 = vmatpush1.xpose.msra.mxu0 0.0
        %1127 = vmatprep.subr.mxu0 0.0
        %1128 = vmatpush1.xpose.msra.mxu0 0.0
        %1129 = vmatprep.subr.mxu0 0.0
        %1130 = vmatpush1.xpose.msra.mxu0 0.0
        %1131 = vmatprep.subr.mxu0 0.0
        %1132 = vmatpush1.xpose.msra.mxu0 0.0
        %1133 = vmatprep.subr.mxu0 0.0
        %1134 = vmatpush1.xpose.msra.mxu0 0.0
        %1135 = vmatprep.subr.mxu0 0.0
        %1136 = vmatpush1.xpose.msra.mxu0 0.0
        %1137 = vmatprep.subr.mxu0 0.0
        %1138 = vmatpush1.xpose.msra.mxu0 0.0
        %1139 = vmatprep.subr.mxu0 0.0
        %1140 = vmatpush1.xpose.msra.mxu0 0.0
        %1141 = vmatprep.subr.mxu0 0.0
        %1142 = vmatpush1.xpose.msra.mxu0 0.0
        %1143 = vmatprep.subr.mxu0 0.0
        %1144 = vmatpush1.xpose.msra.mxu0 0.0
        %1145 = vmatprep.subr.mxu0 0.0
        %1146 = vmatpush1.xpose.msra.mxu0 0.0
        %1147 = vmatprep.subr.mxu0 0.0
        %1148 = vmatpush1.xpose.msra.mxu0 0.0
        %1149 = vmatprep.subr.mxu0 0.0
        %1150 = vmatpush1.xpose.msra.mxu0 0.0
        %1151 = vmatprep.subr.mxu0 0.0
        %1152 = vmatpush1.xpose.msra.mxu0 0.0
        %1153 = vmatprep.subr.mxu0 0.0
        %1154 = vmatpush1.xpose.msra.mxu0 0.0
        %1155 = vmatprep.subr.mxu0 0.0
        %1156 = vmatpush1.xpose.msra.mxu0 0.0
        %1157 = vmatprep.subr.mxu0 0.0
        %1158 = vmatpush1.xpose.msra.mxu0 0.0
        %1159 = vmatprep.subr.mxu0 0.0
        %1160 = vmatpush1.xpose.msra.mxu0 0.0
        %1161 = vmatprep.mubr.f32.mxu0 0.0
        %1162 = vmatmul.mubr.f32.gmra.mrb[0].mxu0 %v1093
        %v1163 = vpop.f32.mrb[0].mxu0
        %v1164 = vadd.f32 0.0, %v1163
        %v1165 = vpop.f32.mrb[0].mxu0
        %1166 = vdwg.mxu0
        %v1167 = vsel %vm755, %v1164, -inf
        %v1168 = vsel %vm834, %v1167, -inf
        %1169 = vmax.xlane.f32.xlu0 %v1168
        %v1170 = vpop.xlane.xlu0 %1169
        %v1171 = vsub.f32 %v1167, %v1170
        %v1172 = vmul.f32 %v1171, 1.442695
        %v1173 = vpow.pop %v1172
        %v1174 = vsel %vm834, %v1173, 0.0
        %1175 = vadd.xlane.f32.xlu0 %v1174
        %v1176 = vpop.xlane.xlu0 %1175
        %v1177 = vrcp.pop %v1176
        %v1178 = vmul.f32 %v1173, %v1177
        %1179 = vrot.lane.b32.xlu0 %v748, 112
        %v1180 = vpop.permute.xlu0 %1179
        %v1183 = vsel %vm834, %v1178, 0
        %1185 = vmatprep.subr.mxu0 0.0
        %1186 = vmatpush1.msra.mxu0 %v1180
        %1187 = vmatprep.subr.mxu0 0.0
        %1188 = vmatpush1.msra.mxu0 0.0
        %1189 = vmatprep.subr.mxu0 0.0
        %1190 = vmatpush1.msra.mxu0 0.0
        %1191 = vmatprep.subr.mxu0 0.0
        %1192 = vmatpush1.msra.mxu0 0.0
        %1193 = vmatprep.subr.mxu0 0.0
        %1194 = vmatpush1.msra.mxu0 0.0
        %1195 = vmatprep.subr.mxu0 0.0
        %1196 = vmatpush1.msra.mxu0 0.0
        %1197 = vmatprep.subr.mxu0 0.0
        %1198 = vmatpush1.msra.mxu0 0.0
        %1199 = vmatprep.subr.mxu0 0.0
        %1200 = vmatpush1.msra.mxu0 0.0
        %1201 = vmatprep.subr.mxu0 0.0
        %1202 = vmatpush1.msra.mxu0 0.0
        %1203 = vmatprep.subr.mxu0 0.0
        %1204 = vmatpush1.msra.mxu0 0.0
        %1205 = vmatprep.subr.mxu0 0.0
        %1206 = vmatpush1.msra.mxu0 0.0
        %1207 = vmatprep.subr.mxu0 0.0
        %1208 = vmatpush1.msra.mxu0 0.0
        %1209 = vmatprep.subr.mxu0 0.0
        %1210 = vmatpush1.msra.mxu0 0.0
        %1211 = vmatprep.subr.mxu0 0.0
        %1212 = vmatpush1.msra.mxu0 0.0
        %1213 = vmatprep.subr.mxu0 0.0
        %1214 = vmatpush1.msra.mxu0 0.0
        %1215 = vmatprep.subr.mxu0 0.0
        %1216 = vmatpush1.msra.mxu0 0.0
        %1217 = vmatprep.subr.mxu0 0.0
        %1218 = vmatpush1.msra.mxu0 0.0
        %1219 = vmatprep.subr.mxu0 0.0
        %1220 = vmatpush1.msra.mxu0 0.0
        %1221 = vmatprep.subr.mxu0 0.0
        %1222 = vmatpush1.msra.mxu0 0.0
        %1223 = vmatprep.subr.mxu0 0.0
        %1224 = vmatpush1.msra.mxu0 0.0
        %1225 = vmatprep.subr.mxu0 0.0
        %1226 = vmatpush1.msra.mxu0 0.0
        %1227 = vmatprep.subr.mxu0 0.0
        %1228 = vmatpush1.msra.mxu0 0.0
        %1229 = vmatprep.subr.mxu0 0.0
        %1230 = vmatpush1.msra.mxu0 0.0
        %1231 = vmatprep.subr.mxu0 0.0
        %1232 = vmatpush1.msra.mxu0 0.0
        %1233 = vmatprep.subr.mxu0 0.0
        %1234 = vmatpush1.msra.mxu0 0.0
        %1235 = vmatprep.subr.mxu0 0.0
        %1236 = vmatpush1.msra.mxu0 0.0
        %1237 = vmatprep.subr.mxu0 0.0
        %1238 = vmatpush1.msra.mxu0 0.0
        %1239 = vmatprep.subr.mxu0 0.0
        %1240 = vmatpush1.msra.mxu0 0.0
        %1241 = vmatprep.subr.mxu0 0.0
        %1242 = vmatpush1.msra.mxu0 0.0
        %1243 = vmatprep.subr.mxu0 0.0
        %1244 = vmatpush1.msra.mxu0 0.0
        %1245 = vmatprep.subr.mxu0 0.0
        %1246 = vmatpush1.msra.mxu0 0.0
        %1247 = vmatprep.subr.mxu0 0.0
        %1248 = vmatpush1.msra.mxu0 0.0
        %1249 = vmatprep.mubr.f32.mxu0 0.0
        %1250 = vmatmul.mubr.f32.gmra.mrb[0].mxu0 %v1183
        %v1251 = vpop.f32.mrb[0].mxu0
        %v1252 = vadd.f32 0.0, %v1251
        %v1253 = vpop.f32.mrb[0].mxu0
        %1254 = vdwg.mxu0
        %s1255 = scalar_lea.vmem %s399, 16 [#allocation2]
        %1256 = vst.msk [vmem:[%s1255] sm:$0xff] %vm834, %v1252
        %1257 = vrot.lane.b32.xlu0 %v495, 116
        %v1258 = vpop.permute.xlu0 %1257
        %1259 = vrot.lane.b32.xlu0 %v580, 116
        %v1260 = vpop.permute.xlu0 %1259
        %v1261 = vsel %vm756, %v1258, 0
        %v1263 = vsel %vm756, %v1260, 0
        %1265 = vmatprep.subr.mxu0 0.0
        %1266 = vmatpush1.xpose.msra.mxu0 %v1263
        %1267 = vmatprep.subr.mxu0 0.0
        %1268 = vmatpush1.xpose.msra.mxu0 0.0
        %1269 = vmatprep.subr.mxu0 0.0
        %1270 = vmatpush1.xpose.msra.mxu0 0.0
        %1271 = vmatprep.subr.mxu0 0.0
        %1272 = vmatpush1.xpose.msra.mxu0 0.0
        %1273 = vmatprep.subr.mxu0 0.0
        %1274 = vmatpush1.xpose.msra.mxu0 0.0
        %1275 = vmatprep.subr.mxu0 0.0
        %1276 = vmatpush1.xpose.msra.mxu0 0.0
        %1277 = vmatprep.subr.mxu0 0.0
        %1278 = vmatpush1.xpose.msra.mxu0 0.0
        %1279 = vmatprep.subr.mxu0 0.0
        %1280 = vmatpush1.xpose.msra.mxu0 0.0
        %1281 = vmatprep.subr.mxu0 0.0
        %1282 = vmatpush1.xpose.msra.mxu0 0.0
        %1283 = vmatprep.subr.mxu0 0.0
        %1284 = vmatpush1.xpose.msra.mxu0 0.0
        %1285 = vmatprep.subr.mxu0 0.0
        %1286 = vmatpush1.xpose.msra.mxu0 0.0
        %1287 = vmatprep.subr.mxu0 0.0
        %1288 = vmatpush1.xpose.msra.mxu0 0.0
        %1289 = vmatprep.subr.mxu0 0.0
        %1290 = vmatpush1.xpose.msra.mxu0 0.0
        %1291 = vmatprep.subr.mxu0 0.0
        %1292 = vmatpush1.xpose.msra.mxu0 0.0
        %1293 = vmatprep.subr.mxu0 0.0
        %1294 = vmatpush1.xpose.msra.mxu0 0.0
        %1295 = vmatprep.subr.mxu0 0.0
        %1296 = vmatpush1.xpose.msra.mxu0 0.0
        %1297 = vmatprep.subr.mxu0 0.0
        %1298 = vmatpush1.xpose.msra.mxu0 0.0
        %1299 = vmatprep.subr.mxu0 0.0
        %1300 = vmatpush1.xpose.msra.mxu0 0.0
        %1301 = vmatprep.subr.mxu0 0.0
        %1302 = vmatpush1.xpose.msra.mxu0 0.0
        %1303 = vmatprep.subr.mxu0 0.0
        %1304 = vmatpush1.xpose.msra.mxu0 0.0
        %1305 = vmatprep.subr.mxu0 0.0
        %1306 = vmatpush1.xpose.msra.mxu0 0.0
        %1307 = vmatprep.subr.mxu0 0.0
        %1308 = vmatpush1.xpose.msra.mxu0 0.0
        %1309 = vmatprep.subr.mxu0 0.0
        %1310 = vmatpush1.xpose.msra.mxu0 0.0
        %1311 = vmatprep.subr.mxu0 0.0
        %1312 = vmatpush1.xpose.msra.mxu0 0.0
        %1313 = vmatprep.subr.mxu0 0.0
        %1314 = vmatpush1.xpose.msra.mxu0 0.0
        %1315 = vmatprep.subr.mxu0 0.0
        %1316 = vmatpush1.xpose.msra.mxu0 0.0
        %1317 = vmatprep.subr.mxu0 0.0
        %1318 = vmatpush1.xpose.msra.mxu0 0.0
        %1319 = vmatprep.subr.mxu0 0.0
        %1320 = vmatpush1.xpose.msra.mxu0 0.0
        %1321 = vmatprep.subr.mxu0 0.0
        %1322 = vmatpush1.xpose.msra.mxu0 0.0
        %1323 = vmatprep.subr.mxu0 0.0
        %1324 = vmatpush1.xpose.msra.mxu0 0.0
        %1325 = vmatprep.subr.mxu0 0.0
        %1326 = vmatpush1.xpose.msra.mxu0 0.0
        %1327 = vmatprep.subr.mxu0 0.0
        %1328 = vmatpush1.xpose.msra.mxu0 0.0
        %1329 = vmatprep.mubr.f32.mxu0 0.0
        %1330 = vmatmul.mubr.f32.gmra.mrb[0].mxu0 %v1261
        %v1331 = vpop.f32.mrb[0].mxu0
        %v1332 = vadd.f32 0.0, %v1331
        %v1333 = vpop.f32.mrb[0].mxu0
        %1334 = vdwg.mxu0
        %v1335 = vsel %vm755, %v1332, -inf
        %v1336 = vsel %vm834, %v1335, -inf
        %1337 = vmax.xlane.f32.xlu0 %v1336
        %v1338 = vpop.xlane.xlu0 %1337
        %v1339 = vsub.f32 %v1335, %v1338
        %v1340 = vmul.f32 %v1339, 1.442695
        %v1341 = vpow.pop %v1340
        %v1342 = vsel %vm834, %v1341, 0.0
        %1343 = vadd.xlane.f32.xlu0 %v1342
        %v1344 = vpop.xlane.xlu0 %1343
        %v1345 = vrcp.pop %v1344
        %v1346 = vmul.f32 %v1341, %v1345
        %1347 = vrot.lane.b32.xlu0 %v748, 104
        %v1348 = vpop.permute.xlu0 %1347
        %v1351 = vsel %vm834, %v1346, 0
        %1353 = vmatprep.subr.mxu0 0.0
        %1354 = vmatpush1.msra.mxu0 %v1348
        %1355 = vmatprep.subr.mxu0 0.0
        %1356 = vmatpush1.msra.mxu0 0.0
        %1357 = vmatprep.subr.mxu0 0.0
        %1358 = vmatpush1.msra.mxu0 0.0
        %1359 = vmatprep.subr.mxu0 0.0
        %1360 = vmatpush1.msra.mxu0 0.0
        %1361 = vmatprep.subr.mxu0 0.0
        %1362 = vmatpush1.msra.mxu0 0.0
        %1363 = vmatprep.subr.mxu0 0.0
        %1364 = vmatpush1.msra.mxu0 0.0
        %1365 = vmatprep.subr.mxu0 0.0
        %1366 = vmatpush1.msra.mxu0 0.0
        %1367 = vmatprep.subr.mxu0 0.0
        %1368 = vmatpush1.msra.mxu0 0.0
        %1369 = vmatprep.subr.mxu0 0.0
        %1370 = vmatpush1.msra.mxu0 0.0
        %1371 = vmatprep.subr.mxu0 0.0
        %1372 = vmatpush1.msra.mxu0 0.0
        %1373 = vmatprep.subr.mxu0 0.0
        %1374 = vmatpush1.msra.mxu0 0.0
        %1375 = vmatprep.subr.mxu0 0.0
        %1376 = vmatpush1.msra.mxu0 0.0
        %1377 = vmatprep.subr.mxu0 0.0
        %1378 = vmatpush1.msra.mxu0 0.0
        %1379 = vmatprep.subr.mxu0 0.0
        %1380 = vmatpush1.msra.mxu0 0.0
        %1381 = vmatprep.subr.mxu0 0.0
        %1382 = vmatpush1.msra.mxu0 0.0
        %1383 = vmatprep.subr.mxu0 0.0
        %1384 = vmatpush1.msra.mxu0 0.0
        %1385 = vmatprep.subr.mxu0 0.0
        %1386 = vmatpush1.msra.mxu0 0.0
        %1387 = vmatprep.subr.mxu0 0.0
        %1388 = vmatpush1.msra.mxu0 0.0
        %1389 = vmatprep.subr.mxu0 0.0
        %1390 = vmatpush1.msra.mxu0 0.0
        %1391 = vmatprep.subr.mxu0 0.0
        %1392 = vmatpush1.msra.mxu0 0.0
        %1393 = vmatprep.subr.mxu0 0.0
        %1394 = vmatpush1.msra.mxu0 0.0
        %1395 = vmatprep.subr.mxu0 0.0
        %1396 = vmatpush1.msra.mxu0 0.0
        %1397 = vmatprep.subr.mxu0 0.0
        %1398 = vmatpush1.msra.mxu0 0.0
        %1399 = vmatprep.subr.mxu0 0.0
        %1400 = vmatpush1.msra.mxu0 0.0
        %1401 = vmatprep.subr.mxu0 0.0
        %1402 = vmatpush1.msra.mxu0 0.0
        %1403 = vmatprep.subr.mxu0 0.0
        %1404 = vmatpush1.msra.mxu0 0.0
        %1405 = vmatprep.subr.mxu0 0.0
        %1406 = vmatpush1.msra.mxu0 0.0
        %1407 = vmatprep.subr.mxu0 0.0
        %1408 = vmatpush1.msra.mxu0 0.0
        %1409 = vmatprep.subr.mxu0 0.0
        %1410 = vmatpush1.msra.mxu0 0.0
        %1411 = vmatprep.subr.mxu0 0.0
        %1412 = vmatpush1.msra.mxu0 0.0
        %1413 = vmatprep.subr.mxu0 0.0
        %1414 = vmatpush1.msra.mxu0 0.0
        %1415 = vmatprep.subr.mxu0 0.0
        %1416 = vmatpush1.msra.mxu0 0.0
        %1417 = vmatprep.mubr.f32.mxu0 0.0
        %1418 = vmatmul.mubr.f32.gmra.mrb[0].mxu0 %v1351
        %v1419 = vpop.f32.mrb[0].mxu0
        %v1420 = vadd.f32 0.0, %v1419
        %v1421 = vpop.f32.mrb[0].mxu0
        %1422 = vdwg.mxu0
        %s1423 = scalar_lea.vmem %s399, 24 [#allocation2]
        %1424 = vst.msk [vmem:[%s1423] sm:$0xff] %vm834, %v1420
        %s1425 = sand.u32 %s276, 1
        %s1426 = sand.u32 %s276, 1
        %s1427 = smul.addr %s1426, 32
        %s1428 = scalar_lea.vmem [#allocation2], %s1427
        // Predicated region
        $region65: #{masked_mha_forward.2} parent=63 // pred_check
          %p1429 = pneg %p286
        $region66: #{masked_mha_forward.2} parent=63 // pred_check_branch
          %1431 = sbr.rel (%p1429) target = $region68
        $region67: #{masked_mha_forward.2} parent=63 // pred_region
          %s1432 = smul.addr %s22, 8
          %s1433 = scalar_lea.vmem %s11, %s1432
          // Predicated region
          $region69: #{masked_mha_forward.2} parent=67 // pred_check
            _
          $region70: #{masked_mha_forward.2} parent=67 // pred_check_branch
            %1435 = sbr.rel (0) target = $region72
          $region71: #{masked_mha_forward.2} parent=67 // pred_region
            // Predicated region
            $region73: #{masked_mha_forward.2} parent=71 // pred_check
              _
            $region74: #{masked_mha_forward.2} parent=71 // pred_check_branch
              %1437 = sbr.rel (0) target = $region76
            $region75: #{masked_mha_forward.2} parent=71 // pred_region
              // Predicated region
              $region88: #{masked_mha_forward.2} parent=75 // pred_check
                _
              $region89: #{masked_mha_forward.2} parent=75 // pred_check_branch
                %1458 = sbr.rel (0) target = $region91
              $region90: #{masked_mha_forward.2} parent=75 // pred_region
                loop: start=0, step=1, limit=1
                $region92: #{masked_mha_forward.2} parent=90 // loop_pre_header
                  _
                $region93: #{masked_mha_forward.2} parent=90 // loop_header
                  %s1460 = sphi 0, %s1464
                  %p1461 = scmp.ge.s32.totalorder %s1460, 1
                  %s1465 = sphi %s1428, %s1428
                  %s1466 = sphi %s1433, %s1433
                $region94: #{masked_mha_forward.2} parent=90 // loop_header_branch
                  %1463 = sbr.rel (%p1461) target = $region98
                $region95: #{masked_mha_forward.2} parent=90 // loop_body
                  %v1467 = vld [vmem:[%s1465] sm:$0xff]
                  %1468 = vst [vmem:[%s1466] sm:$0xff] %v1467
                  %v1469 = vld [vmem:[%s1465 + $0x8] sm:$0xff]
                  %1470 = vst [vmem:[%s1466 + $0x10] sm:$0xff] %v1469
                  %v1471 = vld [vmem:[%s1465 + $0x10] sm:$0xff]
                  %1472 = vst [vmem:[%s1466 + $0x20] sm:$0xff] %v1471
                  %v1473 = vld [vmem:[%s1465 + $0x18] sm:$0xff]
                  %1474 = vst [vmem:[%s1466 + $0x30] sm:$0xff] %v1473
                $region96: #{masked_mha_forward.2} parent=90 // loop_footer
                  %s1464 = sadd.s32 1, %s1460
                $region97: #{masked_mha_forward.2} parent=90 // loop_footer_branch
                  %1459 = sbr.rel target = $region93
                $region98: #{masked_mha_forward.2} parent=90 // loop_exit
                  _
              $region91: #{masked_mha_forward.2} parent=75 // pred_fallthru
                _
              // Predicated region
              $region99: #{masked_mha_forward.2} parent=75 // pred_check
                _
              $region100: #{masked_mha_forward.2} parent=75 // pred_check_branch
                %1476 = sbr.rel target = $region102
              $region101: #{masked_mha_forward.2} parent=75 // pred_region
                _
              $region102: #{masked_mha_forward.2} parent=75 // pred_fallthru
                _
            $region76: #{masked_mha_forward.2} parent=71 // pred_fallthru
              _
            // Predicated region
            $region77: #{masked_mha_forward.2} parent=71 // pred_check
              _
            $region78: #{masked_mha_forward.2} parent=71 // pred_check_branch
              %1439 = sbr.rel target = $region80
            $region79: #{masked_mha_forward.2} parent=71 // pred_region
              loop: start=0, step=1, limit=1
              $region81: #{masked_mha_forward.2} parent=79 // loop_pre_header
                _
              $region82: #{masked_mha_forward.2} parent=79 // loop_header
                %s1442 = sphi 0, %s1446
                %p1443 = scmp.ge.s32.totalorder %s1442, 1
                %s1447 = sphi %s1428, %s1428
                %s1448 = sphi %s1433, %s1433
              $region83: #{masked_mha_forward.2} parent=79 // loop_header_branch
                %1445 = sbr.rel (%p1443) target = $region87
              $region84: #{masked_mha_forward.2} parent=79 // loop_body
                %v1449 = vld [vmem:[%s1447] sm:$0xff]
                %1450 = vst [vmem:[%s1448] sm:$0xff] %v1449
                %v1451 = vld [vmem:[%s1447 + $0x8] sm:$0xff]
                %1452 = vst [vmem:[%s1448 + $0x10] sm:$0xff] %v1451
                %v1453 = vld [vmem:[%s1447 + $0x10] sm:$0xff]
                %1454 = vst [vmem:[%s1448 + $0x20] sm:$0xff] %v1453
                %v1455 = vld [vmem:[%s1447 + $0x18] sm:$0xff]
                %1456 = vst [vmem:[%s1448 + $0x30] sm:$0xff] %v1455
              $region85: #{masked_mha_forward.2} parent=79 // loop_footer
                %s1446 = sadd.s32 1, %s1442
              $region86: #{masked_mha_forward.2} parent=79 // loop_footer_branch
                %1441 = sbr.rel target = $region82
              $region87: #{masked_mha_forward.2} parent=79 // loop_exit
                _
            $region80: #{masked_mha_forward.2} parent=71 // pred_fallthru
              _
          $region72: #{masked_mha_forward.2} parent=67 // pred_fallthru
            _
          %1477 = vnop
        $region68: #{masked_mha_forward.2} parent=63 // pred_fallthru
          _
      $region64: #{masked_mha_forward.2} parent=5 // pred_fallthru
        _
      %p1478 = scmp.le.s32.totalorder 2, %s17
      // Predicated region
      $region103: #{masked_mha_forward.2} parent=5 // pred_check
        %p1479 = pneg %p1478
      $region104: #{masked_mha_forward.2} parent=5 // pred_check_branch
        %1481 = sbr.rel (%p1479) target = $region106
      $region105: #{masked_mha_forward.2} parent=5 // pred_region
        %s1482 = ssub.s32 %s17, 2
        // Predicated region
        $region107: #{masked_mha_forward.2} parent=105 // pred_check
          %p1483 = pneg %p292
        $region108: #{masked_mha_forward.2} parent=105 // pred_check_branch
          %1485 = sbr.rel (%p1483) target = $region110
        $region109: #{masked_mha_forward.2} parent=105 // pred_region
          %s1486 = sand.u32 %s277, 1
          %s1487 = sand.u32 %s277, 1
          %s1488 = smul.addr %s1487, 32
          %s1489 = scalar_lea.vmem [#allocation2], %s1488
        $region110: #{masked_mha_forward.2} parent=105 // pred_fallthru
          _
      $region106: #{masked_mha_forward.2} parent=5 // pred_fallthru
        _
    $region6: #{masked_mha_forward.2} parent=1 // loop_footer
      %s21 = sadd.s32 1, %s17
    $region7: #{masked_mha_forward.2} parent=1 // loop_footer_branch
      %16 = sbr.rel target = $region3
    $region8: #{masked_mha_forward.2} parent=1 // loop_exit
      _

</llo_original>
